<compile_context>
chip_gen: v7x
topology: tpu7x:2x2x1
jax: 0.10.0
libtpu: 0.0.40
codegen_flags: <defaults>
</compile_context>

<pallas_src>
import numpy as np
import jax
import jax.numpy as jnp
from jax.experimental import pallas as pl
from jax.experimental.pallas import tpu as pltpu

# ---- small, DistilBERT-shaped config (synthetic) ----
B, S, H = 2, 8, 32          # batch, seq_len, hidden
NH, DH = 4, 8               # num heads, head dim (NH*DH == H)
FFN = 64                    # feed-forward width
LAYERS = 2                  # encoder layers
VOCAB = 50
MAX_POS = 16
NUM_CLASSES = 6             # toxic-comments multilabel head
CPAD = 128                  # lane-dense padded classifier width
POOL_ROWS = 8               # pooled/output rows padded to one full sublane group
LN_EPS = 1e-12
MXU_DTYPE = jnp.bfloat16    # MXU operand dtype on all generations (f32 accumulation)

N_KERNEL_INPUTS = 19


def _layernorm(x, g, b):
    mu = jnp.mean(x, axis=-1, keepdims=True)
    var = jnp.mean((x - mu) ** 2, axis=-1, keepdims=True)
    return (x - mu) * jax.lax.rsqrt(var + LN_EPS) * g + b


# -------------------- fused Pallas kernel --------------------

def fused_kernel(emb_ref, bias_ref, pool_ref, emb_g_ref, emb_b_ref,
                 wqkv_ref, bqkv_ref, wo_ref, bo_ref,
                 ln1g_ref, ln1b_ref, w1_ref, b1_ref, w2_ref, b2_ref,
                 ln2g_ref, ln2b_ref, clfw_ref, clfb_ref, out_ref):
    """Embedding LN -> LAYERS post-LN transformer blocks -> mean-pool -> classifier."""
    scale = 1.0 / (DH ** 0.5)
    bias = bias_ref[...]                                  # (B*S, B*S) additive mask

    # Per-head lane masks, hoisted out of the layer loop (JAX does not CSE them).
    col = jax.lax.broadcasted_iota(jnp.int32, (1, H), 1)
    head_masks = []
    for h in range(NH):
        in_head = (col >= h * DH) & (col < (h + 1) * DH)
        head_masks.append((in_head.astype(MXU_DTYPE), in_head.astype(jnp.float32)))

    # Embedding LayerNorm on the flattened (B*S, H) activation slab.
    x = _layernorm(emb_ref[...], emb_g_ref[...], emb_b_ref[...])      # (B*S, H) f32

    for l in range(LAYERS):                               # static layer loop, weights VMEM-resident
        xb = x.astype(MXU_DTYPE)                          # cast activation once per layer
        qkv = jnp.dot(xb, wqkv_ref[l],
                      preferred_element_type=jnp.float32) + bqkv_ref[l]   # (B*S, 3H)
        q = qkv[:, 0 * H:1 * H].astype(MXU_DTYPE)
        k = qkv[:, 1 * H:2 * H].astype(MXU_DTYPE)
        v = qkv[:, 2 * H:3 * H].astype(MXU_DTYPE)

        ctx = None                                        # merged multi-head context (B*S, H)
        for h in range(NH):                               # static head loop, no lane slices
            hm16, hm32 = head_masks[h]
            qh = q * hm16                                 # zero non-head columns (VPU mul)
            scores = jax.lax.dot_general(                 # (B*S, B*S): per-head scores
                qh, k, (((1,), (1,)), ((), ())),
                preferred_element_type=jnp.float32)
            scores = scores * scale + bias                # block-diag batch + key-pad mask
            scores = scores - jnp.max(scores, axis=-1, keepdims=True)
            p = jnp.exp(scores)
            p = p * pl.reciprocal(jnp.sum(p, axis=-1, keepdims=True), approx=True)
            ctx_h = jnp.dot(p.astype(MXU_DTYPE), v,
                            preferred_element_type=jnp.float32)   # only head cols valid
            contrib = ctx_h * hm32                        # keep head-h columns only
            ctx = contrib if ctx is None else ctx + contrib

        attn = jnp.dot(ctx.astype(MXU_DTYPE), wo_ref[l],
                       preferred_element_type=jnp.float32) + bo_ref[l]    # single Wo GEMM

        sa = _layernorm(attn + x, ln1g_ref[l], ln1b_ref[l])
        h1 = jnp.dot(sa.astype(MXU_DTYPE), w1_ref[l],
                     preferred_element_type=jnp.float32) + b1_ref[l]
        h1 = jax.nn.gelu(h1)   # TODO(synk): HF BERT uses exact erf GELU; tanh approx kept for lowering safety
        h2 = jnp.dot(h1.astype(MXU_DTYPE), w2_ref[l],
                     preferred_element_type=jnp.float32) + b2_ref[l]
        x = _layernorm(h2 + sa, ln2g_ref[l], ln2b_ref[l])

    # Mean-pool over the sequence (includes padded positions, matching the reference
    # `seq_output.mean(axis=1)`), expressed as one constant pooling matmul.
    # dropout(p=0.3) is identity at inference -> omitted.
    pooled = jnp.dot(pool_ref[...], x.astype(MXU_DTYPE),
                     preferred_element_type=jnp.float32)              # (8, H)
    out_ref[...] = jnp.dot(pooled.astype(MXU_DTYPE), clfw_ref[...],
                           preferred_element_type=jnp.float32) + clfb_ref[...]  # (8, CPAD)


# -------------------- wrapper --------------------

@jax.jit
def forward(input_ids, attention_mask, params):
    # Embedding gather + position add is glue (data-dependent gather); rest is one Pallas call.
    emb = (jnp.take(params["word_emb"], input_ids, axis=0)
           + params["pos_emb"][:S][None, :, :]).reshape(B * S, H)

    # Block-diagonal additive attention bias over the flattened tokens:
    # 0 where (same batch AND key attended), -1e9 otherwise.
    m = attention_mask.reshape(-1).astype(jnp.float32)               # (B*S,)
    batch_id = jnp.arange(B * S, dtype=jnp.int32) // S
    same = (batch_id[:, None] == batch_id[None, :]).astype(jnp.float32)
    attn_bias = (same * m[None, :] - 1.0) * 1e9                      # (B*S, B*S)

    # Constant pooling matrix: rows 0..B-1 hold 1/S over their sequence block,
    # rows B..7 are zero padding (full sublane group for a lane-dense store).
    pool_np = np.zeros((POOL_ROWS, B * S), np.float32)
    for b in range(B):
        pool_np[b, b * S:(b + 1) * S] = 1.0 / S
    pool = jnp.asarray(pool_np, dtype=MXU_DTYPE)

    vmem_spec = pl.BlockSpec(memory_space=pltpu.MemorySpace.VMEM)
    logits_padded = pl.pallas_call(
        fused_kernel,
        out_shape=jax.ShapeDtypeStruct((POOL_ROWS, CPAD), jnp.float32),
        in_specs=[vmem_spec] * N_KERNEL_INPUTS,
        out_specs=vmem_spec,
        compiler_params=pltpu.CompilerParams(vmem_limit_bytes=4 * 1024 * 1024),
    )(emb, attn_bias, pool,
      params["emb_ln_g"], params["emb_ln_b"],
      params["wqkv"], params["bqkv"], params["wo"], params["bo"],
      params["ln1_g"], params["ln1_b"], params["w1"], params["b1"],
      params["w2"], params["b2"], params["ln2_g"], params["ln2_b"],
      params["clf_w"], params["clf_b"])
    return logits_padded[:B, :NUM_CLASSES]


# -------------------- deterministic parameter init --------------------

def init_params(key):
    def nrm(k, shape, scale=0.02, dtype=jnp.float32):
        return (scale * jax.random.normal(k, shape, jnp.float32)).astype(dtype)

    keys = jax.random.split(key, 9)
    wq = nrm(keys[2], (LAYERS, H, H))
    wk = nrm(keys[3], (LAYERS, H, H))
    wv = nrm(keys[4], (LAYERS, H, H))
    params = {
        "word_emb": nrm(keys[0], (VOCAB, H)),
        "pos_emb":  nrm(keys[1], (MAX_POS, H)),
        "emb_ln_g": jnp.ones((1, H), jnp.float32),
        "emb_ln_b": jnp.zeros((1, H), jnp.float32),
        # fused, stacked per-layer weights, stored in bf16 (MXU operand dtype)
        "wqkv": jnp.concatenate([wq, wk, wv], axis=-1).astype(jnp.bfloat16),  # (L, H, 3H)
        "bqkv": jnp.zeros((LAYERS, 1, 3 * H), jnp.float32),
        "wo": nrm(keys[5], (LAYERS, H, H), dtype=jnp.bfloat16),
        "bo": jnp.zeros((LAYERS, 1, H), jnp.float32),
        "ln1_g": jnp.ones((LAYERS, 1, H), jnp.float32),
        "ln1_b": jnp.zeros((LAYERS, 1, H), jnp.float32),
        "w1": nrm(keys[6], (LAYERS, H, FFN), dtype=jnp.bfloat16),
        "b1": jnp.zeros((LAYERS, 1, FFN), jnp.float32),
        "w2": nrm(keys[7], (LAYERS, FFN, H), dtype=jnp.bfloat16),
        "b2": jnp.zeros((LAYERS, 1, H), jnp.float32),
        "ln2_g": jnp.ones((LAYERS, 1, H), jnp.float32),
        "ln2_b": jnp.zeros((LAYERS, 1, H), jnp.float32),
    }
    # Classifier weights padded to CPAD=128 output lanes (only first NUM_CLASSES cols used).
    clf_w = jnp.zeros((H, CPAD), jnp.float32).at[:, :NUM_CLASSES].set(
        nrm(keys[8], (H, NUM_CLASSES)))
    params["clf_w"] = clf_w.astype(jnp.bfloat16)
    params["clf_b"] = jnp.zeros((1, CPAD), jnp.float32)
    return params


if __name__ == "__main__":
    key = jax.random.PRNGKey(0)
    pkey, ikey = jax.random.split(key)
    params = init_params(pkey)

    input_ids = jax.random.randint(ikey, (B, S), 0, VOCAB, dtype=jnp.int32)
    attention_mask = jnp.ones((B, S), jnp.int32).at[1, 6:].set(0)  # pad last 2 tokens of row 1

    # TODO(synk): head_mask (per-head gating) is not exercised (module passes None by default).
    logits = forward(input_ids, attention_mask, params)
    jax.block_until_ready(logits)
    assert logits.shape == (B, NUM_CLASSES) and logits.dtype == jnp.float32
    print("KERNEL_OK")
</pallas_src>

<mosaic_0001>
module attributes {stable_mosaic.version = 11 : i64} {
  func.func @fused_kernel(%arg0: memref<16x32xf32, #tpu.memory_space<vmem>>, %arg1: memref<16x16xf32, #tpu.memory_space<vmem>>, %arg2: memref<8x16xbf16, #tpu.memory_space<vmem>>, %arg3: memref<1x32xf32, #tpu.memory_space<vmem>>, %arg4: memref<1x32xf32, #tpu.memory_space<vmem>>, %arg5: memref<2x32x96xbf16, #tpu.memory_space<vmem>>, %arg6: memref<2x1x96xf32, #tpu.memory_space<vmem>>, %arg7: memref<2x32x32xbf16, #tpu.memory_space<vmem>>, %arg8: memref<2x1x32xf32, #tpu.memory_space<vmem>>, %arg9: memref<2x1x32xf32, #tpu.memory_space<vmem>>, %arg10: memref<2x1x32xf32, #tpu.memory_space<vmem>>, %arg11: memref<2x32x64xbf16, #tpu.memory_space<vmem>>, %arg12: memref<2x1x64xf32, #tpu.memory_space<vmem>>, %arg13: memref<2x64x32xbf16, #tpu.memory_space<vmem>>, %arg14: memref<2x1x32xf32, #tpu.memory_space<vmem>>, %arg15: memref<2x1x32xf32, #tpu.memory_space<vmem>>, %arg16: memref<2x1x32xf32, #tpu.memory_space<vmem>>, %arg17: memref<32x128xbf16, #tpu.memory_space<vmem>>, %arg18: memref<1x128xf32, #tpu.memory_space<vmem>>, %arg19: memref<8x128xf32, #tpu.memory_space<vmem>>) attributes {dimension_semantics = [], scalar_prefetch = 0 : i64, scratch_operands = 0 : i64, tpu.core_type = #tpu.core_type<tc>} {
    %c0 = arith.constant 0 : index
    %c0_0 = arith.constant 0 : index
    %0 = vector.load %arg1[%c0, %c0_0] : memref<16x16xf32, #tpu.memory_space<vmem>>, vector<16x16xf32>
    %1 = tpu.iota {dimensions = array<i32: 1>} : vector<1x32xi32>
    %c0_i32 = arith.constant 0 : i32
    %2 = vector.broadcast %c0_i32 : i32 to vector<1x32xi32>
    %3 = arith.cmpi sge, %1, %2 : vector<1x32xi32>
    %c8_i32 = arith.constant 8 : i32
    %4 = vector.broadcast %c8_i32 : i32 to vector<1x32xi32>
    %5 = arith.cmpi slt, %1, %4 : vector<1x32xi32>
    %6 = arith.andi %3, %5 : vector<1x32xi1>
    %7 = arith.extui %6 : vector<1x32xi1> to vector<1x32xi32>
    %8 = arith.sitofp %7 : vector<1x32xi32> to vector<1x32xf32>
    %9 = arith.truncf %8 : vector<1x32xf32> to vector<1x32xbf16>
    %10 = arith.extui %6 : vector<1x32xi1> to vector<1x32xi32>
    %11 = arith.sitofp %10 : vector<1x32xi32> to vector<1x32xf32>
    %c8_i32_1 = arith.constant 8 : i32
    %12 = vector.broadcast %c8_i32_1 : i32 to vector<1x32xi32>
    %13 = arith.cmpi sge, %1, %12 : vector<1x32xi32>
    %c16_i32 = arith.constant 16 : i32
    %14 = vector.broadcast %c16_i32 : i32 to vector<1x32xi32>
    %15 = arith.cmpi slt, %1, %14 : vector<1x32xi32>
    %16 = arith.andi %13, %15 : vector<1x32xi1>
    %17 = arith.extui %16 : vector<1x32xi1> to vector<1x32xi32>
    %18 = arith.sitofp %17 : vector<1x32xi32> to vector<1x32xf32>
    %19 = arith.truncf %18 : vector<1x32xf32> to vector<1x32xbf16>
    %20 = arith.extui %16 : vector<1x32xi1> to vector<1x32xi32>
    %21 = arith.sitofp %20 : vector<1x32xi32> to vector<1x32xf32>
    %c16_i32_2 = arith.constant 16 : i32
    %22 = vector.broadcast %c16_i32_2 : i32 to vector<1x32xi32>
    %23 = arith.cmpi sge, %1, %22 : vector<1x32xi32>
    %c24_i32 = arith.constant 24 : i32
    %24 = vector.broadcast %c24_i32 : i32 to vector<1x32xi32>
    %25 = arith.cmpi slt, %1, %24 : vector<1x32xi32>
    %26 = arith.andi %23, %25 : vector<1x32xi1>
    %27 = arith.extui %26 : vector<1x32xi1> to vector<1x32xi32>
    %28 = arith.sitofp %27 : vector<1x32xi32> to vector<1x32xf32>
    %29 = arith.truncf %28 : vector<1x32xf32> to vector<1x32xbf16>
    %30 = arith.extui %26 : vector<1x32xi1> to vector<1x32xi32>
    %31 = arith.sitofp %30 : vector<1x32xi32> to vector<1x32xf32>
    %c24_i32_3 = arith.constant 24 : i32
    %32 = vector.broadcast %c24_i32_3 : i32 to vector<1x32xi32>
    %33 = arith.cmpi sge, %1, %32 : vector<1x32xi32>
    %c32_i32 = arith.constant 32 : i32
    %34 = vector.broadcast %c32_i32 : i32 to vector<1x32xi32>
    %35 = arith.cmpi slt, %1, %34 : vector<1x32xi32>
    %36 = arith.andi %33, %35 : vector<1x32xi1>
    %37 = arith.extui %36 : vector<1x32xi1> to vector<1x32xi32>
    %38 = arith.sitofp %37 : vector<1x32xi32> to vector<1x32xf32>
    %39 = arith.truncf %38 : vector<1x32xf32> to vector<1x32xbf16>
    %40 = arith.extui %36 : vector<1x32xi1> to vector<1x32xi32>
    %41 = arith.sitofp %40 : vector<1x32xi32> to vector<1x32xf32>
    %c0_4 = arith.constant 0 : index
    %c0_5 = arith.constant 0 : index
    %42 = vector.load %arg0[%c0_4, %c0_5] : memref<16x32xf32, #tpu.memory_space<vmem>>, vector<16x32xf32>
    %c0_6 = arith.constant 0 : index
    %c0_7 = arith.constant 0 : index
    %43 = vector.load %arg3[%c0_6, %c0_7] : memref<1x32xf32, #tpu.memory_space<vmem>>, vector<1x32xf32>
    %c0_8 = arith.constant 0 : index
    %c0_9 = arith.constant 0 : index
    %44 = vector.load %arg4[%c0_8, %c0_9] : memref<1x32xf32, #tpu.memory_space<vmem>>, vector<1x32xf32>
    %cst = arith.constant dense<0.000000e+00> : vector<16xf32>
    %45 = vector.multi_reduction <add>, %42, %cst [1] : vector<16x32xf32> to vector<16xf32>
    %46 = vector.shape_cast %45 : vector<16xf32> to vector<16x1xf32>
    %cst_10 = arith.constant 3.200000e+01 : f32
    %47 = vector.broadcast %cst_10 : f32 to vector<16x1xf32>
    %48 = arith.divf %46, %47 : vector<16x1xf32>
    %49 = vector.broadcast %48 : vector<16x1xf32> to vector<16x32xf32>
    %50 = arith.subf %42, %49 : vector<16x32xf32>
    %51 = arith.mulf %50, %50 : vector<16x32xf32>
    %cst_11 = arith.constant dense<0.000000e+00> : vector<16xf32>
    %52 = vector.multi_reduction <add>, %51, %cst_11 [1] : vector<16x32xf32> to vector<16xf32>
    %53 = vector.shape_cast %52 : vector<16xf32> to vector<16x1xf32>
    %cst_12 = arith.constant 3.200000e+01 : f32
    %54 = vector.broadcast %cst_12 : f32 to vector<16x1xf32>
    %55 = arith.divf %53, %54 : vector<16x1xf32>
    %56 = vector.broadcast %48 : vector<16x1xf32> to vector<16x32xf32>
    %57 = arith.subf %42, %56 : vector<16x32xf32>
    %cst_13 = arith.constant 9.99999996E-13 : f32
    %58 = vector.broadcast %cst_13 : f32 to vector<16x1xf32>
    %59 = arith.addf %55, %58 : vector<16x1xf32>
    %60 = math.rsqrt %59 : vector<16x1xf32>
    %61 = vector.broadcast %60 : vector<16x1xf32> to vector<16x32xf32>
    %62 = arith.mulf %57, %61 : vector<16x32xf32>
    %63 = vector.broadcast %43 : vector<1x32xf32> to vector<16x32xf32>
    %64 = arith.mulf %62, %63 : vector<16x32xf32>
    %65 = vector.broadcast %44 : vector<1x32xf32> to vector<16x32xf32>
    %66 = arith.addf %64, %65 : vector<16x32xf32>
    %67 = arith.truncf %66 : vector<16x32xf32> to vector<16x32xbf16>
    %c0_14 = arith.constant 0 : index
    %c0_15 = arith.constant 0 : index
    %c0_16 = arith.constant 0 : index
    %68 = vector.load %arg5[%c0_14, %c0_15, %c0_16] : memref<2x32x96xbf16, #tpu.memory_space<vmem>>, vector<1x32x96xbf16>
    %69 = vector.shape_cast %68 : vector<1x32x96xbf16> to vector<32x96xbf16>
    %cst_17 = arith.constant dense<0.000000e+00> : vector<16x96xf32>
    %70 = tpu.matmul %67, %69, %cst_17 {dimension_numbers = #tpu.dot_dimension_numbers<[1], [0], [0], [1], [0, 0, 1, 1], [], []>} : vector<16x32xbf16>, vector<32x96xbf16>, vector<16x96xf32> -> vector<16x96xf32>
    %c0_18 = arith.constant 0 : index
    %c0_19 = arith.constant 0 : index
    %c0_20 = arith.constant 0 : index
    %71 = vector.load %arg6[%c0_18, %c0_19, %c0_20] : memref<2x1x96xf32, #tpu.memory_space<vmem>>, vector<1x1x96xf32>
    %72 = vector.shape_cast %71 : vector<1x1x96xf32> to vector<1x96xf32>
    %73 = vector.broadcast %72 : vector<1x96xf32> to vector<16x96xf32>
    %74 = arith.addf %70, %73 : vector<16x96xf32>
    %75 = vector.extract_strided_slice %74 {offsets = [0, 0], sizes = [16, 32], strides = [1, 1]} : vector<16x96xf32> to vector<16x32xf32>
    %76 = arith.truncf %75 : vector<16x32xf32> to vector<16x32xbf16>
    %77 = vector.extract_strided_slice %74 {offsets = [0, 32], sizes = [16, 32], strides = [1, 1]} : vector<16x96xf32> to vector<16x32xf32>
    %78 = arith.truncf %77 : vector<16x32xf32> to vector<16x32xbf16>
    %79 = vector.extract_strided_slice %74 {offsets = [0, 64], sizes = [16, 32], strides = [1, 1]} : vector<16x96xf32> to vector<16x32xf32>
    %80 = arith.truncf %79 : vector<16x32xf32> to vector<16x32xbf16>
    %81 = vector.broadcast %9 : vector<1x32xbf16> to vector<16x32xbf16>
    %82 = arith.mulf %76, %81 : vector<16x32xbf16>
    %cst_21 = arith.constant dense<0.000000e+00> : vector<16x16xf32>
    %83 = tpu.matmul %82, %78, %cst_21 {dimension_numbers = #tpu.dot_dimension_numbers<[1], [1], [0], [0], [0, 0, 1, 0], [], []>} : vector<16x32xbf16>, vector<16x32xbf16>, vector<16x16xf32> -> vector<16x16xf32>
    %cst_22 = arith.constant 0.353553385 : f32
    %84 = vector.broadcast %cst_22 : f32 to vector<16x16xf32>
    %85 = arith.mulf %83, %84 : vector<16x16xf32>
    %86 = arith.addf %85, %0 : vector<16x16xf32>
    %cst_23 = arith.constant dense<0xFF800000> : vector<16xf32>
    %87 = vector.multi_reduction <maximumf>, %86, %cst_23 [1] : vector<16x16xf32> to vector<16xf32>
    %88 = vector.shape_cast %87 : vector<16xf32> to vector<16x1xf32>
    %89 = vector.broadcast %88 : vector<16x1xf32> to vector<16x16xf32>
    %90 = arith.subf %86, %89 : vector<16x16xf32>
    %91 = math.exp %90 : vector<16x16xf32>
    %cst_24 = arith.constant dense<0.000000e+00> : vector<16xf32>
    %92 = vector.multi_reduction <add>, %91, %cst_24 [1] : vector<16x16xf32> to vector<16xf32>
    %93 = vector.shape_cast %92 : vector<16xf32> to vector<16x1xf32>
    %94 = tpu.reciprocal %93 {approx = true} : vector<16x1xf32> -> vector<16x1xf32>
    %95 = vector.broadcast %94 : vector<16x1xf32> to vector<16x16xf32>
    %96 = arith.mulf %91, %95 : vector<16x16xf32>
    %97 = arith.truncf %96 : vector<16x16xf32> to vector<16x16xbf16>
    %cst_25 = arith.constant dense<0.000000e+00> : vector<16x32xf32>
    %98 = tpu.matmul %97, %80, %cst_25 {dimension_numbers = #tpu.dot_dimension_numbers<[1], [0], [0], [1], [0, 0, 1, 1], [], []>} : vector<16x16xbf16>, vector<16x32xbf16>, vector<16x32xf32> -> vector<16x32xf32>
    %99 = vector.broadcast %11 : vector<1x32xf32> to vector<16x32xf32>
    %100 = arith.mulf %98, %99 : vector<16x32xf32>
    %101 = vector.broadcast %19 : vector<1x32xbf16> to vector<16x32xbf16>
    %102 = arith.mulf %76, %101 : vector<16x32xbf16>
    %cst_26 = arith.constant dense<0.000000e+00> : vector<16x16xf32>
    %103 = tpu.matmul %102, %78, %cst_26 {dimension_numbers = #tpu.dot_dimension_numbers<[1], [1], [0], [0], [0, 0, 1, 0], [], []>} : vector<16x32xbf16>, vector<16x32xbf16>, vector<16x16xf32> -> vector<16x16xf32>
    %cst_27 = arith.constant 0.353553385 : f32
    %104 = vector.broadcast %cst_27 : f32 to vector<16x16xf32>
    %105 = arith.mulf %103, %104 : vector<16x16xf32>
    %106 = arith.addf %105, %0 : vector<16x16xf32>
    %cst_28 = arith.constant dense<0xFF800000> : vector<16xf32>
    %107 = vector.multi_reduction <maximumf>, %106, %cst_28 [1] : vector<16x16xf32> to vector<16xf32>
    %108 = vector.shape_cast %107 : vector<16xf32> to vector<16x1xf32>
    %109 = vector.broadcast %108 : vector<16x1xf32> to vector<16x16xf32>
    %110 = arith.subf %106, %109 : vector<16x16xf32>
    %111 = math.exp %110 : vector<16x16xf32>
    %cst_29 = arith.constant dense<0.000000e+00> : vector<16xf32>
    %112 = vector.multi_reduction <add>, %111, %cst_29 [1] : vector<16x16xf32> to vector<16xf32>
    %113 = vector.shape_cast %112 : vector<16xf32> to vector<16x1xf32>
    %114 = tpu.reciprocal %113 {approx = true} : vector<16x1xf32> -> vector<16x1xf32>
    %115 = vector.broadcast %114 : vector<16x1xf32> to vector<16x16xf32>
    %116 = arith.mulf %111, %115 : vector<16x16xf32>
    %117 = arith.truncf %116 : vector<16x16xf32> to vector<16x16xbf16>
    %cst_30 = arith.constant dense<0.000000e+00> : vector<16x32xf32>
    %118 = tpu.matmul %117, %80, %cst_30 {dimension_numbers = #tpu.dot_dimension_numbers<[1], [0], [0], [1], [0, 0, 1, 1], [], []>} : vector<16x16xbf16>, vector<16x32xbf16>, vector<16x32xf32> -> vector<16x32xf32>
    %119 = vector.broadcast %21 : vector<1x32xf32> to vector<16x32xf32>
    %120 = arith.mulf %118, %119 : vector<16x32xf32>
    %121 = arith.addf %100, %120 : vector<16x32xf32>
    %122 = vector.broadcast %29 : vector<1x32xbf16> to vector<16x32xbf16>
    %123 = arith.mulf %76, %122 : vector<16x32xbf16>
    %cst_31 = arith.constant dense<0.000000e+00> : vector<16x16xf32>
    %124 = tpu.matmul %123, %78, %cst_31 {dimension_numbers = #tpu.dot_dimension_numbers<[1], [1], [0], [0], [0, 0, 1, 0], [], []>} : vector<16x32xbf16>, vector<16x32xbf16>, vector<16x16xf32> -> vector<16x16xf32>
    %cst_32 = arith.constant 0.353553385 : f32
    %125 = vector.broadcast %cst_32 : f32 to vector<16x16xf32>
    %126 = arith.mulf %124, %125 : vector<16x16xf32>
    %127 = arith.addf %126, %0 : vector<16x16xf32>
    %cst_33 = arith.constant dense<0xFF800000> : vector<16xf32>
    %128 = vector.multi_reduction <maximumf>, %127, %cst_33 [1] : vector<16x16xf32> to vector<16xf32>
    %129 = vector.shape_cast %128 : vector<16xf32> to vector<16x1xf32>
    %130 = vector.broadcast %129 : vector<16x1xf32> to vector<16x16xf32>
    %131 = arith.subf %127, %130 : vector<16x16xf32>
    %132 = math.exp %131 : vector<16x16xf32>
    %cst_34 = arith.constant dense<0.000000e+00> : vector<16xf32>
    %133 = vector.multi_reduction <add>, %132, %cst_34 [1] : vector<16x16xf32> to vector<16xf32>
    %134 = vector.shape_cast %133 : vector<16xf32> to vector<16x1xf32>
    %135 = tpu.reciprocal %134 {approx = true} : vector<16x1xf32> -> vector<16x1xf32>
    %136 = vector.broadcast %135 : vector<16x1xf32> to vector<16x16xf32>
    %137 = arith.mulf %132, %136 : vector<16x16xf32>
    %138 = arith.truncf %137 : vector<16x16xf32> to vector<16x16xbf16>
    %cst_35 = arith.constant dense<0.000000e+00> : vector<16x32xf32>
    %139 = tpu.matmul %138, %80, %cst_35 {dimension_numbers = #tpu.dot_dimension_numbers<[1], [0], [0], [1], [0, 0, 1, 1], [], []>} : vector<16x16xbf16>, vector<16x32xbf16>, vector<16x32xf32> -> vector<16x32xf32>
    %140 = vector.broadcast %31 : vector<1x32xf32> to vector<16x32xf32>
    %141 = arith.mulf %139, %140 : vector<16x32xf32>
    %142 = arith.addf %121, %141 : vector<16x32xf32>
    %143 = vector.broadcast %39 : vector<1x32xbf16> to vector<16x32xbf16>
    %144 = arith.mulf %76, %143 : vector<16x32xbf16>
    %cst_36 = arith.constant dense<0.000000e+00> : vector<16x16xf32>
    %145 = tpu.matmul %144, %78, %cst_36 {dimension_numbers = #tpu.dot_dimension_numbers<[1], [1], [0], [0], [0, 0, 1, 0], [], []>} : vector<16x32xbf16>, vector<16x32xbf16>, vector<16x16xf32> -> vector<16x16xf32>
    %cst_37 = arith.constant 0.353553385 : f32
    %146 = vector.broadcast %cst_37 : f32 to vector<16x16xf32>
    %147 = arith.mulf %145, %146 : vector<16x16xf32>
    %148 = arith.addf %147, %0 : vector<16x16xf32>
    %cst_38 = arith.constant dense<0xFF800000> : vector<16xf32>
    %149 = vector.multi_reduction <maximumf>, %148, %cst_38 [1] : vector<16x16xf32> to vector<16xf32>
    %150 = vector.shape_cast %149 : vector<16xf32> to vector<16x1xf32>
    %151 = vector.broadcast %150 : vector<16x1xf32> to vector<16x16xf32>
    %152 = arith.subf %148, %151 : vector<16x16xf32>
    %153 = math.exp %152 : vector<16x16xf32>
    %cst_39 = arith.constant dense<0.000000e+00> : vector<16xf32>
    %154 = vector.multi_reduction <add>, %153, %cst_39 [1] : vector<16x16xf32> to vector<16xf32>
    %155 = vector.shape_cast %154 : vector<16xf32> to vector<16x1xf32>
    %156 = tpu.reciprocal %155 {approx = true} : vector<16x1xf32> -> vector<16x1xf32>
    %157 = vector.broadcast %156 : vector<16x1xf32> to vector<16x16xf32>
    %158 = arith.mulf %153, %157 : vector<16x16xf32>
    %159 = arith.truncf %158 : vector<16x16xf32> to vector<16x16xbf16>
    %cst_40 = arith.constant dense<0.000000e+00> : vector<16x32xf32>
    %160 = tpu.matmul %159, %80, %cst_40 {dimension_numbers = #tpu.dot_dimension_numbers<[1], [0], [0], [1], [0, 0, 1, 1], [], []>} : vector<16x16xbf16>, vector<16x32xbf16>, vector<16x32xf32> -> vector<16x32xf32>
    %161 = vector.broadcast %41 : vector<1x32xf32> to vector<16x32xf32>
    %162 = arith.mulf %160, %161 : vector<16x32xf32>
    %163 = arith.addf %142, %162 : vector<16x32xf32>
    %164 = arith.truncf %163 : vector<16x32xf32> to vector<16x32xbf16>
    %c0_41 = arith.constant 0 : index
    %c0_42 = arith.constant 0 : index
    %c0_43 = arith.constant 0 : index
    %165 = vector.load %arg7[%c0_41, %c0_42, %c0_43] : memref<2x32x32xbf16, #tpu.memory_space<vmem>>, vector<1x32x32xbf16>
    %166 = vector.shape_cast %165 : vector<1x32x32xbf16> to vector<32x32xbf16>
    %cst_44 = arith.constant dense<0.000000e+00> : vector<16x32xf32>
    %167 = tpu.matmul %164, %166, %cst_44 {dimension_numbers = #tpu.dot_dimension_numbers<[1], [0], [0], [1], [0, 0, 1, 1], [], []>} : vector<16x32xbf16>, vector<32x32xbf16>, vector<16x32xf32> -> vector<16x32xf32>
    %c0_45 = arith.constant 0 : index
    %c0_46 = arith.constant 0 : index
    %c0_47 = arith.constant 0 : index
    %168 = vector.load %arg8[%c0_45, %c0_46, %c0_47] : memref<2x1x32xf32, #tpu.memory_space<vmem>>, vector<1x1x32xf32>
    %169 = vector.shape_cast %168 : vector<1x1x32xf32> to vector<1x32xf32>
    %170 = vector.broadcast %169 : vector<1x32xf32> to vector<16x32xf32>
    %171 = arith.addf %167, %170 : vector<16x32xf32>
    %172 = arith.addf %171, %66 : vector<16x32xf32>
    %c0_48 = arith.constant 0 : index
    %c0_49 = arith.constant 0 : index
    %c0_50 = arith.constant 0 : index
    %173 = vector.load %arg9[%c0_48, %c0_49, %c0_50] : memref<2x1x32xf32, #tpu.memory_space<vmem>>, vector<1x1x32xf32>
    %174 = vector.shape_cast %173 : vector<1x1x32xf32> to vector<1x32xf32>
    %c0_51 = arith.constant 0 : index
    %c0_52 = arith.constant 0 : index
    %c0_53 = arith.constant 0 : index
    %175 = vector.load %arg10[%c0_51, %c0_52, %c0_53] : memref<2x1x32xf32, #tpu.memory_space<vmem>>, vector<1x1x32xf32>
    %176 = vector.shape_cast %175 : vector<1x1x32xf32> to vector<1x32xf32>
    %cst_54 = arith.constant dense<0.000000e+00> : vector<16xf32>
    %177 = vector.multi_reduction <add>, %172, %cst_54 [1] : vector<16x32xf32> to vector<16xf32>
    %178 = vector.shape_cast %177 : vector<16xf32> to vector<16x1xf32>
    %cst_55 = arith.constant 3.200000e+01 : f32
    %179 = vector.broadcast %cst_55 : f32 to vector<16x1xf32>
    %180 = arith.divf %178, %179 : vector<16x1xf32>
    %181 = vector.broadcast %180 : vector<16x1xf32> to vector<16x32xf32>
    %182 = arith.subf %172, %181 : vector<16x32xf32>
    %183 = arith.mulf %182, %182 : vector<16x32xf32>
    %cst_56 = arith.constant dense<0.000000e+00> : vector<16xf32>
    %184 = vector.multi_reduction <add>, %183, %cst_56 [1] : vector<16x32xf32> to vector<16xf32>
    %185 = vector.shape_cast %184 : vector<16xf32> to vector<16x1xf32>
    %cst_57 = arith.constant 3.200000e+01 : f32
    %186 = vector.broadcast %cst_57 : f32 to vector<16x1xf32>
    %187 = arith.divf %185, %186 : vector<16x1xf32>
    %188 = vector.broadcast %180 : vector<16x1xf32> to vector<16x32xf32>
    %189 = arith.subf %172, %188 : vector<16x32xf32>
    %cst_58 = arith.constant 9.99999996E-13 : f32
    %190 = vector.broadcast %cst_58 : f32 to vector<16x1xf32>
    %191 = arith.addf %187, %190 : vector<16x1xf32>
    %192 = math.rsqrt %191 : vector<16x1xf32>
    %193 = vector.broadcast %192 : vector<16x1xf32> to vector<16x32xf32>
    %194 = arith.mulf %189, %193 : vector<16x32xf32>
    %195 = vector.broadcast %174 : vector<1x32xf32> to vector<16x32xf32>
    %196 = arith.mulf %194, %195 : vector<16x32xf32>
    %197 = vector.broadcast %176 : vector<1x32xf32> to vector<16x32xf32>
    %198 = arith.addf %196, %197 : vector<16x32xf32>
    %199 = arith.truncf %198 : vector<16x32xf32> to vector<16x32xbf16>
    %c0_59 = arith.constant 0 : index
    %c0_60 = arith.constant 0 : index
    %c0_61 = arith.constant 0 : index
    %200 = vector.load %arg11[%c0_59, %c0_60, %c0_61] : memref<2x32x64xbf16, #tpu.memory_space<vmem>>, vector<1x32x64xbf16>
    %201 = vector.shape_cast %200 : vector<1x32x64xbf16> to vector<32x64xbf16>
    %cst_62 = arith.constant dense<0.000000e+00> : vector<16x64xf32>
    %202 = tpu.matmul %199, %201, %cst_62 {dimension_numbers = #tpu.dot_dimension_numbers<[1], [0], [0], [1], [0, 0, 1, 1], [], []>} : vector<16x32xbf16>, vector<32x64xbf16>, vector<16x64xf32> -> vector<16x64xf32>
    %c0_63 = arith.constant 0 : index
    %c0_64 = arith.constant 0 : index
    %c0_65 = arith.constant 0 : index
    %203 = vector.load %arg12[%c0_63, %c0_64, %c0_65] : memref<2x1x64xf32, #tpu.memory_space<vmem>>, vector<1x1x64xf32>
    %204 = vector.shape_cast %203 : vector<1x1x64xf32> to vector<1x64xf32>
    %205 = vector.broadcast %204 : vector<1x64xf32> to vector<16x64xf32>
    %206 = arith.addf %202, %205 : vector<16x64xf32>
    %207 = arith.mulf %206, %206 : vector<16x64xf32>
    %208 = arith.mulf %206, %207 : vector<16x64xf32>
    %cst_66 = arith.constant 4.471500e-02 : f32
    %209 = vector.broadcast %cst_66 : f32 to vector<16x64xf32>
    %210 = arith.mulf %209, %208 : vector<16x64xf32>
    %211 = arith.addf %206, %210 : vector<16x64xf32>
    %cst_67 = arith.constant 0.797884583 : f32
    %212 = vector.broadcast %cst_67 : f32 to vector<16x64xf32>
    %213 = arith.mulf %212, %211 : vector<16x64xf32>
    %214 = math.tanh %213 : vector<16x64xf32>
    %cst_68 = arith.constant 1.000000e+00 : f32
    %215 = vector.broadcast %cst_68 : f32 to vector<16x64xf32>
    %216 = arith.addf %215, %214 : vector<16x64xf32>
    %cst_69 = arith.constant 5.000000e-01 : f32
    %217 = vector.broadcast %cst_69 : f32 to vector<16x64xf32>
    %218 = arith.mulf %217, %216 : vector<16x64xf32>
    %219 = arith.mulf %206, %218 : vector<16x64xf32>
    %220 = arith.truncf %219 : vector<16x64xf32> to vector<16x64xbf16>
    %c0_70 = arith.constant 0 : index
    %c0_71 = arith.constant 0 : index
    %c0_72 = arith.constant 0 : index
    %221 = vector.load %arg13[%c0_70, %c0_71, %c0_72] : memref<2x64x32xbf16, #tpu.memory_space<vmem>>, vector<1x64x32xbf16>
    %222 = vector.shape_cast %221 : vector<1x64x32xbf16> to vector<64x32xbf16>
    %cst_73 = arith.constant dense<0.000000e+00> : vector<16x32xf32>
    %223 = tpu.matmul %220, %222, %cst_73 {dimension_numbers = #tpu.dot_dimension_numbers<[1], [0], [0], [1], [0, 0, 1, 1], [], []>} : vector<16x64xbf16>, vector<64x32xbf16>, vector<16x32xf32> -> vector<16x32xf32>
    %c0_74 = arith.constant 0 : index
    %c0_75 = arith.constant 0 : index
    %c0_76 = arith.constant 0 : index
    %224 = vector.load %arg14[%c0_74, %c0_75, %c0_76] : memref<2x1x32xf32, #tpu.memory_space<vmem>>, vector<1x1x32xf32>
    %225 = vector.shape_cast %224 : vector<1x1x32xf32> to vector<1x32xf32>
    %226 = vector.broadcast %225 : vector<1x32xf32> to vector<16x32xf32>
    %227 = arith.addf %223, %226 : vector<16x32xf32>
    %228 = arith.addf %227, %198 : vector<16x32xf32>
    %c0_77 = arith.constant 0 : index
    %c0_78 = arith.constant 0 : index
    %c0_79 = arith.constant 0 : index
    %229 = vector.load %arg15[%c0_77, %c0_78, %c0_79] : memref<2x1x32xf32, #tpu.memory_space<vmem>>, vector<1x1x32xf32>
    %230 = vector.shape_cast %229 : vector<1x1x32xf32> to vector<1x32xf32>
    %c0_80 = arith.constant 0 : index
    %c0_81 = arith.constant 0 : index
    %c0_82 = arith.constant 0 : index
    %231 = vector.load %arg16[%c0_80, %c0_81, %c0_82] : memref<2x1x32xf32, #tpu.memory_space<vmem>>, vector<1x1x32xf32>
    %232 = vector.shape_cast %231 : vector<1x1x32xf32> to vector<1x32xf32>
    %cst_83 = arith.constant dense<0.000000e+00> : vector<16xf32>
    %233 = vector.multi_reduction <add>, %228, %cst_83 [1] : vector<16x32xf32> to vector<16xf32>
    %234 = vector.shape_cast %233 : vector<16xf32> to vector<16x1xf32>
    %cst_84 = arith.constant 3.200000e+01 : f32
    %235 = vector.broadcast %cst_84 : f32 to vector<16x1xf32>
    %236 = arith.divf %234, %235 : vector<16x1xf32>
    %237 = vector.broadcast %236 : vector<16x1xf32> to vector<16x32xf32>
    %238 = arith.subf %228, %237 : vector<16x32xf32>
    %239 = arith.mulf %238, %238 : vector<16x32xf32>
    %cst_85 = arith.constant dense<0.000000e+00> : vector<16xf32>
    %240 = vector.multi_reduction <add>, %239, %cst_85 [1] : vector<16x32xf32> to vector<16xf32>
    %241 = vector.shape_cast %240 : vector<16xf32> to vector<16x1xf32>
    %cst_86 = arith.constant 3.200000e+01 : f32
    %242 = vector.broadcast %cst_86 : f32 to vector<16x1xf32>
    %243 = arith.divf %241, %242 : vector<16x1xf32>
    %244 = vector.broadcast %236 : vector<16x1xf32> to vector<16x32xf32>
    %245 = arith.subf %228, %244 : vector<16x32xf32>
    %cst_87 = arith.constant 9.99999996E-13 : f32
    %246 = vector.broadcast %cst_87 : f32 to vector<16x1xf32>
    %247 = arith.addf %243, %246 : vector<16x1xf32>
    %248 = math.rsqrt %247 : vector<16x1xf32>
    %249 = vector.broadcast %248 : vector<16x1xf32> to vector<16x32xf32>
    %250 = arith.mulf %245, %249 : vector<16x32xf32>
    %251 = vector.broadcast %230 : vector<1x32xf32> to vector<16x32xf32>
    %252 = arith.mulf %250, %251 : vector<16x32xf32>
    %253 = vector.broadcast %232 : vector<1x32xf32> to vector<16x32xf32>
    %254 = arith.addf %252, %253 : vector<16x32xf32>
    %255 = arith.truncf %254 : vector<16x32xf32> to vector<16x32xbf16>
    %c1 = arith.constant 1 : index
    %c0_88 = arith.constant 0 : index
    %c0_89 = arith.constant 0 : index
    %256 = vector.load %arg5[%c1, %c0_88, %c0_89] : memref<2x32x96xbf16, #tpu.memory_space<vmem>>, vector<1x32x96xbf16>
    %257 = vector.shape_cast %256 : vector<1x32x96xbf16> to vector<32x96xbf16>
    %cst_90 = arith.constant dense<0.000000e+00> : vector<16x96xf32>
    %258 = tpu.matmul %255, %257, %cst_90 {dimension_numbers = #tpu.dot_dimension_numbers<[1], [0], [0], [1], [0, 0, 1, 1], [], []>} : vector<16x32xbf16>, vector<32x96xbf16>, vector<16x96xf32> -> vector<16x96xf32>
    %c1_91 = arith.constant 1 : index
    %c0_92 = arith.constant 0 : index
    %c0_93 = arith.constant 0 : index
    %259 = vector.load %arg6[%c1_91, %c0_92, %c0_93] : memref<2x1x96xf32, #tpu.memory_space<vmem>>, vector<1x1x96xf32>
    %260 = vector.shape_cast %259 : vector<1x1x96xf32> to vector<1x96xf32>
    %261 = vector.broadcast %260 : vector<1x96xf32> to vector<16x96xf32>
    %262 = arith.addf %258, %261 : vector<16x96xf32>
    %263 = vector.extract_strided_slice %262 {offsets = [0, 0], sizes = [16, 32], strides = [1, 1]} : vector<16x96xf32> to vector<16x32xf32>
    %264 = arith.truncf %263 : vector<16x32xf32> to vector<16x32xbf16>
    %265 = vector.extract_strided_slice %262 {offsets = [0, 32], sizes = [16, 32], strides = [1, 1]} : vector<16x96xf32> to vector<16x32xf32>
    %266 = arith.truncf %265 : vector<16x32xf32> to vector<16x32xbf16>
    %267 = vector.extract_strided_slice %262 {offsets = [0, 64], sizes = [16, 32], strides = [1, 1]} : vector<16x96xf32> to vector<16x32xf32>
    %268 = arith.truncf %267 : vector<16x32xf32> to vector<16x32xbf16>
    %269 = vector.broadcast %9 : vector<1x32xbf16> to vector<16x32xbf16>
    %270 = arith.mulf %264, %269 : vector<16x32xbf16>
    %cst_94 = arith.constant dense<0.000000e+00> : vector<16x16xf32>
    %271 = tpu.matmul %270, %266, %cst_94 {dimension_numbers = #tpu.dot_dimension_numbers<[1], [1], [0], [0], [0, 0, 1, 0], [], []>} : vector<16x32xbf16>, vector<16x32xbf16>, vector<16x16xf32> -> vector<16x16xf32>
    %cst_95 = arith.constant 0.353553385 : f32
    %272 = vector.broadcast %cst_95 : f32 to vector<16x16xf32>
    %273 = arith.mulf %271, %272 : vector<16x16xf32>
    %274 = arith.addf %273, %0 : vector<16x16xf32>
    %cst_96 = arith.constant dense<0xFF800000> : vector<16xf32>
    %275 = vector.multi_reduction <maximumf>, %274, %cst_96 [1] : vector<16x16xf32> to vector<16xf32>
    %276 = vector.shape_cast %275 : vector<16xf32> to vector<16x1xf32>
    %277 = vector.broadcast %276 : vector<16x1xf32> to vector<16x16xf32>
    %278 = arith.subf %274, %277 : vector<16x16xf32>
    %279 = math.exp %278 : vector<16x16xf32>
    %cst_97 = arith.constant dense<0.000000e+00> : vector<16xf32>
    %280 = vector.multi_reduction <add>, %279, %cst_97 [1] : vector<16x16xf32> to vector<16xf32>
    %281 = vector.shape_cast %280 : vector<16xf32> to vector<16x1xf32>
    %282 = tpu.reciprocal %281 {approx = true} : vector<16x1xf32> -> vector<16x1xf32>
    %283 = vector.broadcast %282 : vector<16x1xf32> to vector<16x16xf32>
    %284 = arith.mulf %279, %283 : vector<16x16xf32>
    %285 = arith.truncf %284 : vector<16x16xf32> to vector<16x16xbf16>
    %cst_98 = arith.constant dense<0.000000e+00> : vector<16x32xf32>
    %286 = tpu.matmul %285, %268, %cst_98 {dimension_numbers = #tpu.dot_dimension_numbers<[1], [0], [0], [1], [0, 0, 1, 1], [], []>} : vector<16x16xbf16>, vector<16x32xbf16>, vector<16x32xf32> -> vector<16x32xf32>
    %287 = vector.broadcast %11 : vector<1x32xf32> to vector<16x32xf32>
    %288 = arith.mulf %286, %287 : vector<16x32xf32>
    %289 = vector.broadcast %19 : vector<1x32xbf16> to vector<16x32xbf16>
    %290 = arith.mulf %264, %289 : vector<16x32xbf16>
    %cst_99 = arith.constant dense<0.000000e+00> : vector<16x16xf32>
    %291 = tpu.matmul %290, %266, %cst_99 {dimension_numbers = #tpu.dot_dimension_numbers<[1], [1], [0], [0], [0, 0, 1, 0], [], []>} : vector<16x32xbf16>, vector<16x32xbf16>, vector<16x16xf32> -> vector<16x16xf32>
    %cst_100 = arith.constant 0.353553385 : f32
    %292 = vector.broadcast %cst_100 : f32 to vector<16x16xf32>
    %293 = arith.mulf %291, %292 : vector<16x16xf32>
    %294 = arith.addf %293, %0 : vector<16x16xf32>
    %cst_101 = arith.constant dense<0xFF800000> : vector<16xf32>
    %295 = vector.multi_reduction <maximumf>, %294, %cst_101 [1] : vector<16x16xf32> to vector<16xf32>
    %296 = vector.shape_cast %295 : vector<16xf32> to vector<16x1xf32>
    %297 = vector.broadcast %296 : vector<16x1xf32> to vector<16x16xf32>
    %298 = arith.subf %294, %297 : vector<16x16xf32>
    %299 = math.exp %298 : vector<16x16xf32>
    %cst_102 = arith.constant dense<0.000000e+00> : vector<16xf32>
    %300 = vector.multi_reduction <add>, %299, %cst_102 [1] : vector<16x16xf32> to vector<16xf32>
    %301 = vector.shape_cast %300 : vector<16xf32> to vector<16x1xf32>
    %302 = tpu.reciprocal %301 {approx = true} : vector<16x1xf32> -> vector<16x1xf32>
    %303 = vector.broadcast %302 : vector<16x1xf32> to vector<16x16xf32>
    %304 = arith.mulf %299, %303 : vector<16x16xf32>
    %305 = arith.truncf %304 : vector<16x16xf32> to vector<16x16xbf16>
    %cst_103 = arith.constant dense<0.000000e+00> : vector<16x32xf32>
    %306 = tpu.matmul %305, %268, %cst_103 {dimension_numbers = #tpu.dot_dimension_numbers<[1], [0], [0], [1], [0, 0, 1, 1], [], []>} : vector<16x16xbf16>, vector<16x32xbf16>, vector<16x32xf32> -> vector<16x32xf32>
    %307 = vector.broadcast %21 : vector<1x32xf32> to vector<16x32xf32>
    %308 = arith.mulf %306, %307 : vector<16x32xf32>
    %309 = arith.addf %288, %308 : vector<16x32xf32>
    %310 = vector.broadcast %29 : vector<1x32xbf16> to vector<16x32xbf16>
    %311 = arith.mulf %264, %310 : vector<16x32xbf16>
    %cst_104 = arith.constant dense<0.000000e+00> : vector<16x16xf32>
    %312 = tpu.matmul %311, %266, %cst_104 {dimension_numbers = #tpu.dot_dimension_numbers<[1], [1], [0], [0], [0, 0, 1, 0], [], []>} : vector<16x32xbf16>, vector<16x32xbf16>, vector<16x16xf32> -> vector<16x16xf32>
    %cst_105 = arith.constant 0.353553385 : f32
    %313 = vector.broadcast %cst_105 : f32 to vector<16x16xf32>
    %314 = arith.mulf %312, %313 : vector<16x16xf32>
    %315 = arith.addf %314, %0 : vector<16x16xf32>
    %cst_106 = arith.constant dense<0xFF800000> : vector<16xf32>
    %316 = vector.multi_reduction <maximumf>, %315, %cst_106 [1] : vector<16x16xf32> to vector<16xf32>
    %317 = vector.shape_cast %316 : vector<16xf32> to vector<16x1xf32>
    %318 = vector.broadcast %317 : vector<16x1xf32> to vector<16x16xf32>
    %319 = arith.subf %315, %318 : vector<16x16xf32>
    %320 = math.exp %319 : vector<16x16xf32>
    %cst_107 = arith.constant dense<0.000000e+00> : vector<16xf32>
    %321 = vector.multi_reduction <add>, %320, %cst_107 [1] : vector<16x16xf32> to vector<16xf32>
    %322 = vector.shape_cast %321 : vector<16xf32> to vector<16x1xf32>
    %323 = tpu.reciprocal %322 {approx = true} : vector<16x1xf32> -> vector<16x1xf32>
    %324 = vector.broadcast %323 : vector<16x1xf32> to vector<16x16xf32>
    %325 = arith.mulf %320, %324 : vector<16x16xf32>
    %326 = arith.truncf %325 : vector<16x16xf32> to vector<16x16xbf16>
    %cst_108 = arith.constant dense<0.000000e+00> : vector<16x32xf32>
    %327 = tpu.matmul %326, %268, %cst_108 {dimension_numbers = #tpu.dot_dimension_numbers<[1], [0], [0], [1], [0, 0, 1, 1], [], []>} : vector<16x16xbf16>, vector<16x32xbf16>, vector<16x32xf32> -> vector<16x32xf32>
    %328 = vector.broadcast %31 : vector<1x32xf32> to vector<16x32xf32>
    %329 = arith.mulf %327, %328 : vector<16x32xf32>
    %330 = arith.addf %309, %329 : vector<16x32xf32>
    %331 = vector.broadcast %39 : vector<1x32xbf16> to vector<16x32xbf16>
    %332 = arith.mulf %264, %331 : vector<16x32xbf16>
    %cst_109 = arith.constant dense<0.000000e+00> : vector<16x16xf32>
    %333 = tpu.matmul %332, %266, %cst_109 {dimension_numbers = #tpu.dot_dimension_numbers<[1], [1], [0], [0], [0, 0, 1, 0], [], []>} : vector<16x32xbf16>, vector<16x32xbf16>, vector<16x16xf32> -> vector<16x16xf32>
    %cst_110 = arith.constant 0.353553385 : f32
    %334 = vector.broadcast %cst_110 : f32 to vector<16x16xf32>
    %335 = arith.mulf %333, %334 : vector<16x16xf32>
    %336 = arith.addf %335, %0 : vector<16x16xf32>
    %cst_111 = arith.constant dense<0xFF800000> : vector<16xf32>
    %337 = vector.multi_reduction <maximumf>, %336, %cst_111 [1] : vector<16x16xf32> to vector<16xf32>
    %338 = vector.shape_cast %337 : vector<16xf32> to vector<16x1xf32>
    %339 = vector.broadcast %338 : vector<16x1xf32> to vector<16x16xf32>
    %340 = arith.subf %336, %339 : vector<16x16xf32>
    %341 = math.exp %340 : vector<16x16xf32>
    %cst_112 = arith.constant dense<0.000000e+00> : vector<16xf32>
    %342 = vector.multi_reduction <add>, %341, %cst_112 [1] : vector<16x16xf32> to vector<16xf32>
    %343 = vector.shape_cast %342 : vector<16xf32> to vector<16x1xf32>
    %344 = tpu.reciprocal %343 {approx = true} : vector<16x1xf32> -> vector<16x1xf32>
    %345 = vector.broadcast %344 : vector<16x1xf32> to vector<16x16xf32>
    %346 = arith.mulf %341, %345 : vector<16x16xf32>
    %347 = arith.truncf %346 : vector<16x16xf32> to vector<16x16xbf16>
    %cst_113 = arith.constant dense<0.000000e+00> : vector<16x32xf32>
    %348 = tpu.matmul %347, %268, %cst_113 {dimension_numbers = #tpu.dot_dimension_numbers<[1], [0], [0], [1], [0, 0, 1, 1], [], []>} : vector<16x16xbf16>, vector<16x32xbf16>, vector<16x32xf32> -> vector<16x32xf32>
    %349 = vector.broadcast %41 : vector<1x32xf32> to vector<16x32xf32>
    %350 = arith.mulf %348, %349 : vector<16x32xf32>
    %351 = arith.addf %330, %350 : vector<16x32xf32>
    %352 = arith.truncf %351 : vector<16x32xf32> to vector<16x32xbf16>
    %c1_114 = arith.constant 1 : index
    %c0_115 = arith.constant 0 : index
    %c0_116 = arith.constant 0 : index
    %353 = vector.load %arg7[%c1_114, %c0_115, %c0_116] : memref<2x32x32xbf16, #tpu.memory_space<vmem>>, vector<1x32x32xbf16>
    %354 = vector.shape_cast %353 : vector<1x32x32xbf16> to vector<32x32xbf16>
    %cst_117 = arith.constant dense<0.000000e+00> : vector<16x32xf32>
    %355 = tpu.matmul %352, %354, %cst_117 {dimension_numbers = #tpu.dot_dimension_numbers<[1], [0], [0], [1], [0, 0, 1, 1], [], []>} : vector<16x32xbf16>, vector<32x32xbf16>, vector<16x32xf32> -> vector<16x32xf32>
    %c1_118 = arith.constant 1 : index
    %c0_119 = arith.constant 0 : index
    %c0_120 = arith.constant 0 : index
    %356 = vector.load %arg8[%c1_118, %c0_119, %c0_120] : memref<2x1x32xf32, #tpu.memory_space<vmem>>, vector<1x1x32xf32>
    %357 = vector.shape_cast %356 : vector<1x1x32xf32> to vector<1x32xf32>
    %358 = vector.broadcast %357 : vector<1x32xf32> to vector<16x32xf32>
    %359 = arith.addf %355, %358 : vector<16x32xf32>
    %360 = arith.addf %359, %254 : vector<16x32xf32>
    %c1_121 = arith.constant 1 : index
    %c0_122 = arith.constant 0 : index
    %c0_123 = arith.constant 0 : index
    %361 = vector.load %arg9[%c1_121, %c0_122, %c0_123] : memref<2x1x32xf32, #tpu.memory_space<vmem>>, vector<1x1x32xf32>
    %362 = vector.shape_cast %361 : vector<1x1x32xf32> to vector<1x32xf32>
    %c1_124 = arith.constant 1 : index
    %c0_125 = arith.constant 0 : index
    %c0_126 = arith.constant 0 : index
    %363 = vector.load %arg10[%c1_124, %c0_125, %c0_126] : memref<2x1x32xf32, #tpu.memory_space<vmem>>, vector<1x1x32xf32>
    %364 = vector.shape_cast %363 : vector<1x1x32xf32> to vector<1x32xf32>
    %cst_127 = arith.constant dense<0.000000e+00> : vector<16xf32>
    %365 = vector.multi_reduction <add>, %360, %cst_127 [1] : vector<16x32xf32> to vector<16xf32>
    %366 = vector.shape_cast %365 : vector<16xf32> to vector<16x1xf32>
    %cst_128 = arith.constant 3.200000e+01 : f32
    %367 = vector.broadcast %cst_128 : f32 to vector<16x1xf32>
    %368 = arith.divf %366, %367 : vector<16x1xf32>
    %369 = vector.broadcast %368 : vector<16x1xf32> to vector<16x32xf32>
    %370 = arith.subf %360, %369 : vector<16x32xf32>
    %371 = arith.mulf %370, %370 : vector<16x32xf32>
    %cst_129 = arith.constant dense<0.000000e+00> : vector<16xf32>
    %372 = vector.multi_reduction <add>, %371, %cst_129 [1] : vector<16x32xf32> to vector<16xf32>
    %373 = vector.shape_cast %372 : vector<16xf32> to vector<16x1xf32>
    %cst_130 = arith.constant 3.200000e+01 : f32
    %374 = vector.broadcast %cst_130 : f32 to vector<16x1xf32>
    %375 = arith.divf %373, %374 : vector<16x1xf32>
    %376 = vector.broadcast %368 : vector<16x1xf32> to vector<16x32xf32>
    %377 = arith.subf %360, %376 : vector<16x32xf32>
    %cst_131 = arith.constant 9.99999996E-13 : f32
    %378 = vector.broadcast %cst_131 : f32 to vector<16x1xf32>
    %379 = arith.addf %375, %378 : vector<16x1xf32>
    %380 = math.rsqrt %379 : vector<16x1xf32>
    %381 = vector.broadcast %380 : vector<16x1xf32> to vector<16x32xf32>
    %382 = arith.mulf %377, %381 : vector<16x32xf32>
    %383 = vector.broadcast %362 : vector<1x32xf32> to vector<16x32xf32>
    %384 = arith.mulf %382, %383 : vector<16x32xf32>
    %385 = vector.broadcast %364 : vector<1x32xf32> to vector<16x32xf32>
    %386 = arith.addf %384, %385 : vector<16x32xf32>
    %387 = arith.truncf %386 : vector<16x32xf32> to vector<16x32xbf16>
    %c1_132 = arith.constant 1 : index
    %c0_133 = arith.constant 0 : index
    %c0_134 = arith.constant 0 : index
    %388 = vector.load %arg11[%c1_132, %c0_133, %c0_134] : memref<2x32x64xbf16, #tpu.memory_space<vmem>>, vector<1x32x64xbf16>
    %389 = vector.shape_cast %388 : vector<1x32x64xbf16> to vector<32x64xbf16>
    %cst_135 = arith.constant dense<0.000000e+00> : vector<16x64xf32>
    %390 = tpu.matmul %387, %389, %cst_135 {dimension_numbers = #tpu.dot_dimension_numbers<[1], [0], [0], [1], [0, 0, 1, 1], [], []>} : vector<16x32xbf16>, vector<32x64xbf16>, vector<16x64xf32> -> vector<16x64xf32>
    %c1_136 = arith.constant 1 : index
    %c0_137 = arith.constant 0 : index
    %c0_138 = arith.constant 0 : index
    %391 = vector.load %arg12[%c1_136, %c0_137, %c0_138] : memref<2x1x64xf32, #tpu.memory_space<vmem>>, vector<1x1x64xf32>
    %392 = vector.shape_cast %391 : vector<1x1x64xf32> to vector<1x64xf32>
    %393 = vector.broadcast %392 : vector<1x64xf32> to vector<16x64xf32>
    %394 = arith.addf %390, %393 : vector<16x64xf32>
    %395 = arith.mulf %394, %394 : vector<16x64xf32>
    %396 = arith.mulf %394, %395 : vector<16x64xf32>
    %cst_139 = arith.constant 4.471500e-02 : f32
    %397 = vector.broadcast %cst_139 : f32 to vector<16x64xf32>
    %398 = arith.mulf %397, %396 : vector<16x64xf32>
    %399 = arith.addf %394, %398 : vector<16x64xf32>
    %cst_140 = arith.constant 0.797884583 : f32
    %400 = vector.broadcast %cst_140 : f32 to vector<16x64xf32>
    %401 = arith.mulf %400, %399 : vector<16x64xf32>
    %402 = math.tanh %401 : vector<16x64xf32>
    %cst_141 = arith.constant 1.000000e+00 : f32
    %403 = vector.broadcast %cst_141 : f32 to vector<16x64xf32>
    %404 = arith.addf %403, %402 : vector<16x64xf32>
    %cst_142 = arith.constant 5.000000e-01 : f32
    %405 = vector.broadcast %cst_142 : f32 to vector<16x64xf32>
    %406 = arith.mulf %405, %404 : vector<16x64xf32>
    %407 = arith.mulf %394, %406 : vector<16x64xf32>
    %408 = arith.truncf %407 : vector<16x64xf32> to vector<16x64xbf16>
    %c1_143 = arith.constant 1 : index
    %c0_144 = arith.constant 0 : index
    %c0_145 = arith.constant 0 : index
    %409 = vector.load %arg13[%c1_143, %c0_144, %c0_145] : memref<2x64x32xbf16, #tpu.memory_space<vmem>>, vector<1x64x32xbf16>
    %410 = vector.shape_cast %409 : vector<1x64x32xbf16> to vector<64x32xbf16>
    %cst_146 = arith.constant dense<0.000000e+00> : vector<16x32xf32>
    %411 = tpu.matmul %408, %410, %cst_146 {dimension_numbers = #tpu.dot_dimension_numbers<[1], [0], [0], [1], [0, 0, 1, 1], [], []>} : vector<16x64xbf16>, vector<64x32xbf16>, vector<16x32xf32> -> vector<16x32xf32>
    %c1_147 = arith.constant 1 : index
    %c0_148 = arith.constant 0 : index
    %c0_149 = arith.constant 0 : index
    %412 = vector.load %arg14[%c1_147, %c0_148, %c0_149] : memref<2x1x32xf32, #tpu.memory_space<vmem>>, vector<1x1x32xf32>
    %413 = vector.shape_cast %412 : vector<1x1x32xf32> to vector<1x32xf32>
    %414 = vector.broadcast %413 : vector<1x32xf32> to vector<16x32xf32>
    %415 = arith.addf %411, %414 : vector<16x32xf32>
    %416 = arith.addf %415, %386 : vector<16x32xf32>
    %c1_150 = arith.constant 1 : index
    %c0_151 = arith.constant 0 : index
    %c0_152 = arith.constant 0 : index
    %417 = vector.load %arg15[%c1_150, %c0_151, %c0_152] : memref<2x1x32xf32, #tpu.memory_space<vmem>>, vector<1x1x32xf32>
    %418 = vector.shape_cast %417 : vector<1x1x32xf32> to vector<1x32xf32>
    %c1_153 = arith.constant 1 : index
    %c0_154 = arith.constant 0 : index
    %c0_155 = arith.constant 0 : index
    %419 = vector.load %arg16[%c1_153, %c0_154, %c0_155] : memref<2x1x32xf32, #tpu.memory_space<vmem>>, vector<1x1x32xf32>
    %420 = vector.shape_cast %419 : vector<1x1x32xf32> to vector<1x32xf32>
    %cst_156 = arith.constant dense<0.000000e+00> : vector<16xf32>
    %421 = vector.multi_reduction <add>, %416, %cst_156 [1] : vector<16x32xf32> to vector<16xf32>
    %422 = vector.shape_cast %421 : vector<16xf32> to vector<16x1xf32>
    %cst_157 = arith.constant 3.200000e+01 : f32
    %423 = vector.broadcast %cst_157 : f32 to vector<16x1xf32>
    %424 = arith.divf %422, %423 : vector<16x1xf32>
    %425 = vector.broadcast %424 : vector<16x1xf32> to vector<16x32xf32>
    %426 = arith.subf %416, %425 : vector<16x32xf32>
    %427 = arith.mulf %426, %426 : vector<16x32xf32>
    %cst_158 = arith.constant dense<0.000000e+00> : vector<16xf32>
    %428 = vector.multi_reduction <add>, %427, %cst_158 [1] : vector<16x32xf32> to vector<16xf32>
    %429 = vector.shape_cast %428 : vector<16xf32> to vector<16x1xf32>
    %cst_159 = arith.constant 3.200000e+01 : f32
    %430 = vector.broadcast %cst_159 : f32 to vector<16x1xf32>
    %431 = arith.divf %429, %430 : vector<16x1xf32>
    %432 = vector.broadcast %424 : vector<16x1xf32> to vector<16x32xf32>
    %433 = arith.subf %416, %432 : vector<16x32xf32>
    %cst_160 = arith.constant 9.99999996E-13 : f32
    %434 = vector.broadcast %cst_160 : f32 to vector<16x1xf32>
    %435 = arith.addf %431, %434 : vector<16x1xf32>
    %436 = math.rsqrt %435 : vector<16x1xf32>
    %437 = vector.broadcast %436 : vector<16x1xf32> to vector<16x32xf32>
    %438 = arith.mulf %433, %437 : vector<16x32xf32>
    %439 = vector.broadcast %418 : vector<1x32xf32> to vector<16x32xf32>
    %440 = arith.mulf %438, %439 : vector<16x32xf32>
    %441 = vector.broadcast %420 : vector<1x32xf32> to vector<16x32xf32>
    %442 = arith.addf %440, %441 : vector<16x32xf32>
    %c0_161 = arith.constant 0 : index
    %c0_162 = arith.constant 0 : index
    %443 = vector.load %arg2[%c0_161, %c0_162] : memref<8x16xbf16, #tpu.memory_space<vmem>>, vector<8x16xbf16>
    %444 = arith.truncf %442 : vector<16x32xf32> to vector<16x32xbf16>
    %cst_163 = arith.constant dense<0.000000e+00> : vector<8x32xf32>
    %445 = tpu.matmul %443, %444, %cst_163 {dimension_numbers = #tpu.dot_dimension_numbers<[1], [0], [0], [1], [0, 0, 1, 1], [], []>} : vector<8x16xbf16>, vector<16x32xbf16>, vector<8x32xf32> -> vector<8x32xf32>
    %446 = arith.truncf %445 : vector<8x32xf32> to vector<8x32xbf16>
    %c0_164 = arith.constant 0 : index
    %c0_165 = arith.constant 0 : index
    %447 = vector.load %arg17[%c0_164, %c0_165] : memref<32x128xbf16, #tpu.memory_space<vmem>>, vector<32x128xbf16>
    %cst_166 = arith.constant dense<0.000000e+00> : vector<8x128xf32>
    %448 = tpu.matmul %446, %447, %cst_166 {dimension_numbers = #tpu.dot_dimension_numbers<[1], [0], [0], [1], [0, 0, 1, 1], [], []>} : vector<8x32xbf16>, vector<32x128xbf16>, vector<8x128xf32> -> vector<8x128xf32>
    %c0_167 = arith.constant 0 : index
    %c0_168 = arith.constant 0 : index
    %449 = vector.load %arg18[%c0_167, %c0_168] : memref<1x128xf32, #tpu.memory_space<vmem>>, vector<1x128xf32>
    %450 = vector.broadcast %449 : vector<1x128xf32> to vector<8x128xf32>
    %451 = arith.addf %448, %450 : vector<8x128xf32>
    %c0_169 = arith.constant 0 : index
    %c0_170 = arith.constant 0 : index
    %452 = vector.load %arg19[%c0_169, %c0_170] : memref<8x128xf32, #tpu.memory_space<vmem>>, vector<8x128xf32>
    tpu.vector_store %arg19[%c0_169, %c0_170], %451 {strides = array<i32>} : memref<8x128xf32, #tpu.memory_space<vmem>>, vector<8x128xf32>,
    return
  }
}

</mosaic_0001>

<llo_original>
// kernel: forward.1
$region0: #{forward.1}
  #allocation0 [shape = 'u32[]', space=smem, size = 0x4, offset = 0x4, fixed_abs, tag = 'smem constant byte address 0x4 - core index']
  #allocation1 [shape = 'u32[144,128]{1,0:T(1,128)}', space=vmem, size = 0x12000, scoped, tag = 'internal scratch']
  %s0 = inlined_call_operand.vmem [shape: f32[16,32], index: 0, kind: input, shape index: {}]
  %s1 = inlined_call_operand.vmem [shape: f32[16,16], index: 1, kind: input, shape index: {}]
  %s2 = inlined_call_operand.vmem [shape: bf16[8,16], index: 2, kind: input, shape index: {}]
  %s3 = inlined_call_operand.vmem [shape: f32[1,32], index: 3, kind: input, shape index: {}]
  %s4 = inlined_call_operand.vmem [shape: f32[1,32], index: 4, kind: input, shape index: {}]
  %s5 = inlined_call_operand.vmem [shape: bf16[2,32,96], index: 5, kind: input, shape index: {}]
  %s6 = inlined_call_operand.vmem [shape: f32[2,1,96], index: 6, kind: input, shape index: {}]
  %s7 = inlined_call_operand.vmem [shape: bf16[2,32,32], index: 7, kind: input, shape index: {}]
  %s8 = inlined_call_operand.vmem [shape: f32[2,1,32], index: 8, kind: input, shape index: {}]
  %s9 = inlined_call_operand.vmem [shape: f32[2,1,32], index: 9, kind: input, shape index: {}]
  %s10 = inlined_call_operand.vmem [shape: f32[2,1,32], index: 10, kind: input, shape index: {}]
  %s11 = inlined_call_operand.vmem [shape: bf16[2,32,64], index: 11, kind: input, shape index: {}]
  %s12 = inlined_call_operand.vmem [shape: f32[2,1,64], index: 12, kind: input, shape index: {}]
  %s13 = inlined_call_operand.vmem [shape: bf16[2,64,32], index: 13, kind: input, shape index: {}]
  %s14 = inlined_call_operand.vmem [shape: f32[2,1,32], index: 14, kind: input, shape index: {}]
  %s15 = inlined_call_operand.vmem [shape: f32[2,1,32], index: 15, kind: input, shape index: {}]
  %s16 = inlined_call_operand.vmem [shape: f32[2,1,32], index: 16, kind: input, shape index: {}]
  %s17 = inlined_call_operand.vmem [shape: bf16[32,128], index: 17, kind: input, shape index: {}]
  %s18 = inlined_call_operand.vmem [shape: f32[1,128], index: 18, kind: input, shape index: {}]
  %s19 = inlined_call_operand.vmem [shape: f32[8,128], index: 19, kind: output, shape index: {}]
  %s20 = sld [smem:[#allocation0]]
  $region86: #{forward.1} parent=0
    _
  %s22 = ssub.s32 1, %s20
  %s23 = scalar_select 0, %s22, %s20
  // Predicated region
  $region2: #{forward.1} parent=0 // pred_check
    _
  $region3: #{forward.1} parent=0 // pred_check_branch
    %25 = sbr.rel (0) target = $region5
  $region4: #{forward.1} parent=0 // pred_region
    _
  $region5: #{forward.1} parent=0 // pred_fallthru
    _
  // Predicated region
  $region6: #{forward.1} parent=0 // pred_check
    _
  $region7: #{forward.1} parent=0 // pred_check_branch
    %27 = sbr.rel (0) target = $region9
  $region8: #{forward.1} parent=0 // pred_region
    _
  $region9: #{forward.1} parent=0 // pred_fallthru
    _
  // Predicated region
  $region10: #{forward.1} parent=0 // pred_check
    _
  $region11: #{forward.1} parent=0 // pred_check_branch
    %29 = sbr.rel (0) target = $region13
  $region12: #{forward.1} parent=0 // pred_region
    _
  $region13: #{forward.1} parent=0 // pred_fallthru
    _
  // Predicated region
  $region14: #{forward.1} parent=0 // pred_check
    _
  $region15: #{forward.1} parent=0 // pred_check_branch
    %31 = sbr.rel (0) target = $region17
  $region16: #{forward.1} parent=0 // pred_region
    _
  $region17: #{forward.1} parent=0 // pred_fallthru
    _
  // Predicated region
  $region18: #{forward.1} parent=0 // pred_check
    _
  $region19: #{forward.1} parent=0 // pred_check_branch
    %33 = sbr.rel (0) target = $region21
  $region20: #{forward.1} parent=0 // pred_region
    _
  $region21: #{forward.1} parent=0 // pred_fallthru
    _
  // Predicated region
  $region22: #{forward.1} parent=0 // pred_check
    _
  $region23: #{forward.1} parent=0 // pred_check_branch
    %35 = sbr.rel (0) target = $region25
  $region24: #{forward.1} parent=0 // pred_region
    _
  $region25: #{forward.1} parent=0 // pred_fallthru
    _
  // Predicated region
  $region26: #{forward.1} parent=0 // pred_check
    _
  $region27: #{forward.1} parent=0 // pred_check_branch
    %37 = sbr.rel (0) target = $region29
  $region28: #{forward.1} parent=0 // pred_region
    _
  $region29: #{forward.1} parent=0 // pred_fallthru
    _
  // Predicated region
  $region30: #{forward.1} parent=0 // pred_check
    _
  $region31: #{forward.1} parent=0 // pred_check_branch
    %39 = sbr.rel (0) target = $region33
  $region32: #{forward.1} parent=0 // pred_region
    _
  $region33: #{forward.1} parent=0 // pred_fallthru
    _
  // Predicated region
  $region34: #{forward.1} parent=0 // pred_check
    _
  $region35: #{forward.1} parent=0 // pred_check_branch
    %41 = sbr.rel (0) target = $region37
  $region36: #{forward.1} parent=0 // pred_region
    _
  $region37: #{forward.1} parent=0 // pred_fallthru
    _
  // Predicated region
  $region38: #{forward.1} parent=0 // pred_check
    _
  $region39: #{forward.1} parent=0 // pred_check_branch
    %43 = sbr.rel (0) target = $region41
  $region40: #{forward.1} parent=0 // pred_region
    _
  $region41: #{forward.1} parent=0 // pred_fallthru
    _
  // Predicated region
  $region42: #{forward.1} parent=0 // pred_check
    _
  $region43: #{forward.1} parent=0 // pred_check_branch
    %45 = sbr.rel (0) target = $region45
  $region44: #{forward.1} parent=0 // pred_region
    _
  $region45: #{forward.1} parent=0 // pred_fallthru
    _
  // Predicated region
  $region46: #{forward.1} parent=0 // pred_check
    _
  $region47: #{forward.1} parent=0 // pred_check_branch
    %47 = sbr.rel (0) target = $region49
  $region48: #{forward.1} parent=0 // pred_region
    _
  $region49: #{forward.1} parent=0 // pred_fallthru
    _
  // Predicated region
  $region50: #{forward.1} parent=0 // pred_check
    _
  $region51: #{forward.1} parent=0 // pred_check_branch
    %49 = sbr.rel (0) target = $region53
  $region52: #{forward.1} parent=0 // pred_region
    _
  $region53: #{forward.1} parent=0 // pred_fallthru
    _
  // Predicated region
  $region54: #{forward.1} parent=0 // pred_check
    _
  $region55: #{forward.1} parent=0 // pred_check_branch
    %51 = sbr.rel (0) target = $region57
  $region56: #{forward.1} parent=0 // pred_region
    _
  $region57: #{forward.1} parent=0 // pred_fallthru
    _
  // Predicated region
  $region58: #{forward.1} parent=0 // pred_check
    _
  $region59: #{forward.1} parent=0 // pred_check_branch
    %53 = sbr.rel (0) target = $region61
  $region60: #{forward.1} parent=0 // pred_region
    _
  $region61: #{forward.1} parent=0 // pred_fallthru
    _
  // Predicated region
  $region62: #{forward.1} parent=0 // pred_check
    _
  $region63: #{forward.1} parent=0 // pred_check_branch
    %55 = sbr.rel (0) target = $region65
  $region64: #{forward.1} parent=0 // pred_region
    _
  $region65: #{forward.1} parent=0 // pred_fallthru
    _
  // Predicated region
  $region66: #{forward.1} parent=0 // pred_check
    _
  $region67: #{forward.1} parent=0 // pred_check_branch
    %57 = sbr.rel (0) target = $region69
  $region68: #{forward.1} parent=0 // pred_region
    _
  $region69: #{forward.1} parent=0 // pred_fallthru
    _
  // Predicated region
  $region70: #{forward.1} parent=0 // pred_check
    _
  $region71: #{forward.1} parent=0 // pred_check_branch
    %59 = sbr.rel (0) target = $region73
  $region72: #{forward.1} parent=0 // pred_region
    _
  $region73: #{forward.1} parent=0 // pred_fallthru
    _
  // Predicated region
  $region74: #{forward.1} parent=0 // pred_check
    _
  $region75: #{forward.1} parent=0 // pred_check_branch
    %61 = sbr.rel (0) target = $region77
  $region76: #{forward.1} parent=0 // pred_region
    _
  $region77: #{forward.1} parent=0 // pred_fallthru
    _
  %v63 = vld [vmem:[%s1] sm:$0xff]
  %v64 = vld [vmem:[%s1 + $0x8] sm:$0xff]
  %v65 = vlaneseq
  %v66 = vand.u32 %v65, 127
  %vm67 = vcmp.ge.s32.totalorder %v66, 0
  %vm68 = vcmp.lt.s32.totalorder %v66, 8
  %vm69 = vmand %vm67, %vm68
  %v70 = vsel %vm69, 1, 0
  %v71 = vcvt.s32.f32 %v70
  %v72 = vpack.c.bf16 %v71, %v71
  %vm73 = vcmp.ge.s32.totalorder %v66, 8
  %vm74 = vcmp.lt.s32.totalorder %v66, 16
  %vm75 = vmand %vm73, %vm74
  %v76 = vsel %vm75, 1, 0
  %v77 = vcvt.s32.f32 %v76
  %v78 = vpack.c.bf16 %v77, %v77
  %vm79 = vcmp.ge.s32.totalorder %v66, 16
  %vm80 = vcmp.lt.s32.totalorder %v66, 24
  %vm81 = vmand %vm79, %vm80
  %v82 = vsel %vm81, 1, 0
  %v83 = vcvt.s32.f32 %v82
  %v84 = vpack.c.bf16 %v83, %v83
  %vm85 = vcmp.ge.s32.totalorder %v66, 24
  %vm86 = vcmp.lt.s32.totalorder %v66, 32
  %vm87 = vmand %vm85, %vm86
  %v88 = vsel %vm87, 1, 0
  %v89 = vcvt.s32.f32 %v88
  %v90 = vpack.c.bf16 %v89, %v89
  %v91 = vld [vmem:[%s0] sm:$0xff]
  %v92 = vld [vmem:[%s0 + $0x8] sm:$0xff]
  %v93 = vld [vmem:[%s3] sm:$0x1]
  %v94 = vld [vmem:[%s4] sm:$0x1]
  %vm95 = vcmask 261120
  %v96 = vsel %vm95, %v91, 0.0
  %97 = vadd.xlane.f32.xlu0 %v96
  %v98 = vpop.xlane.xlu0 %97
  %v99 = vsel %vm95, %v92, 0.0
  %100 = vadd.xlane.f32.xlu0 %v99
  %v101 = vpop.xlane.xlu0 %100
  %v102 = vrcp.pop 32.0
  %v103 = vmul.f32 %v98, %v102
  %v104 = vmul.f32 %v101, %v102
  %v105 = vsub.f32 %v91, %v103
  %v106 = vsub.f32 %v92, %v104
  %v107 = vmul.f32 %v105, %v105
  %v108 = vmul.f32 %v106, %v106
  %v109 = vsel %vm95, %v107, 0.0
  %110 = vadd.xlane.f32.xlu0 %v109
  %v111 = vpop.xlane.xlu0 %110
  %v112 = vsel %vm95, %v108, 0.0
  %113 = vadd.xlane.f32.xlu0 %v112
  %v114 = vpop.xlane.xlu0 %113
  %v115 = vmul.f32 %v111, %v102
  %v116 = vmul.f32 %v114, %v102
  %v117 = vadd.f32 %v115, 1e-12
  %v118 = vadd.f32 %v116, 1e-12
  %v119 = vrsqrt.pop %v117
  %v120 = vrsqrt.pop %v118
  %v121 = vmul.f32 %v105, %v119
  %v122 = vmul.f32 %v106, %v120
  %v124 = vlaneseq
  %v125 = vshrl.u32 %v124, 7
  %v126 = vsub.s32 0, %v125
  %v127 = vrot.slane %v93, %v126
  %v129 = vmul.f32 %v121, %v127
  %v130 = vmul.f32 %v122, %v127
  %v132 = vlaneseq
  %v133 = vshrl.u32 %v132, 7
  %v134 = vsub.s32 0, %v133
  %v135 = vrot.slane %v94, %v134
  %v137 = vadd.f32 %v129, %v135
  %v138 = vadd.f32 %v130, %v135
  %v139 = vpack.c.bf16 %v138, %v137
  %v140 = vld [vmem:[%s5] sm:$0xf]
  %v141 = vld [vmem:[%s5 + $0x4] sm:$0xf]
  %v142 = vld [vmem:[%s5 + $0x8] sm:$0xf]
  %v143 = vld [vmem:[%s5 + $0xc] sm:$0xf]
  %v144 = vld [vmem:[%s6] sm:$0x1]
  %v146 = vlaneseq
  %v147 = vshrl.u32 %v146, 7
  %v148 = vsub.s32 0, %v147
  %v149 = vrot.slane %v144, %v148
  %v155 = vunpack.c.l.b16 %v140
  %v156 = vunpack.c.l.b16 %v141
  %v157 = vunpack.c.l.b16 %v142
  %v158 = vunpack.c.l.b16 %v143
  %v159 = vpack.c.b16 %v156, %v155
  %v160 = vpack.c.b16 %v158, %v157
  %v164 = vsel %vm95, %v139, 0
  %166 = vmatprep.subr.bf16.mxu0 0
  %167 = vmatpush1.bf16.msra.mxu0 %v159
  %168 = vmatprep.subr.bf16.mxu0 0
  %169 = vmatpush1.bf16.msra.mxu0 %v160
  %170 = vmatprep.subr.bf16.mxu0 0
  %171 = vmatpush1.bf16.msra.mxu0 0
  %172 = vmatprep.subr.bf16.mxu0 0
  %173 = vmatpush1.bf16.msra.mxu0 0
  %174 = vmatprep.subr.bf16.mxu0 0
  %175 = vmatpush1.bf16.msra.mxu0 0
  %176 = vmatprep.subr.bf16.mxu0 0
  %177 = vmatpush1.bf16.msra.mxu0 0
  %178 = vmatprep.subr.bf16.mxu0 0
  %179 = vmatpush1.bf16.msra.mxu0 0
  %180 = vmatprep.subr.bf16.mxu0 0
  %181 = vmatpush1.bf16.msra.mxu0 0
  %182 = vmatprep.subr.bf16.mxu0 0
  %183 = vmatpush1.bf16.msra.mxu0 0
  %184 = vmatprep.subr.bf16.mxu0 0
  %185 = vmatpush1.bf16.msra.mxu0 0
  %186 = vmatprep.subr.bf16.mxu0 0
  %187 = vmatpush1.bf16.msra.mxu0 0
  %188 = vmatprep.subr.bf16.mxu0 0
  %189 = vmatpush1.bf16.msra.mxu0 0
  %190 = vmatprep.subr.bf16.mxu0 0
  %191 = vmatpush1.bf16.msra.mxu0 0
  %192 = vmatprep.subr.bf16.mxu0 0
  %193 = vmatpush1.bf16.msra.mxu0 0
  %194 = vmatprep.subr.bf16.mxu0 0
  %195 = vmatpush1.bf16.msra.mxu0 0
  %196 = vmatprep.subr.bf16.mxu0 0
  %197 = vmatpush1.bf16.msra.mxu0 0
  %198 = vmatprep.mubr.bf16.mxu0 0
  %199 = vmatmul.mubr.bf16.gmra.mrb[0].mxu0 %v164
  %v200 = vpop.f32.mrb[0].mxu0
  %v201 = vadd.f32 %v149, %v200
  %v202 = vpop.f32.mrb[0].mxu0
  %v203 = vpop.f32.mrb[0].mxu0
  %v204 = vadd.f32 %v149, %v203
  %v205 = vpop.f32.mrb[0].mxu0
  %206 = vdwg.mxu0
  %v207 = vpack.c.bf16 %v204, %v201
  %v208 = vmul.bf16 %v207, %v72
  %210 = vrot.lane.b32.xlu0 %v207, 96
  %v211 = vpop.permute.xlu0 %210
  %v213 = vsel %vm95, %v208, 0
  %v216 = vsel %vm95, %v211, 0
  %218 = vmatprep.subr.bf16.mxu0 0
  %219 = vmatpush1.bf16.xpose.msra.mxu0 %v216
  %220 = vmatprep.subr.bf16.mxu0 0
  %221 = vmatpush1.bf16.xpose.msra.mxu0 0
  %222 = vmatprep.subr.bf16.mxu0 0
  %223 = vmatpush1.bf16.xpose.msra.mxu0 0
  %224 = vmatprep.subr.bf16.mxu0 0
  %225 = vmatpush1.bf16.xpose.msra.mxu0 0
  %226 = vmatprep.subr.bf16.mxu0 0
  %227 = vmatpush1.bf16.xpose.msra.mxu0 0
  %228 = vmatprep.subr.bf16.mxu0 0
  %229 = vmatpush1.bf16.xpose.msra.mxu0 0
  %230 = vmatprep.subr.bf16.mxu0 0
  %231 = vmatpush1.bf16.xpose.msra.mxu0 0
  %232 = vmatprep.subr.bf16.mxu0 0
  %233 = vmatpush1.bf16.xpose.msra.mxu0 0
  %234 = vmatprep.subr.bf16.mxu0 0
  %235 = vmatpush1.bf16.xpose.msra.mxu0 0
  %236 = vmatprep.subr.bf16.mxu0 0
  %237 = vmatpush1.bf16.xpose.msra.mxu0 0
  %238 = vmatprep.subr.bf16.mxu0 0
  %239 = vmatpush1.bf16.xpose.msra.mxu0 0
  %240 = vmatprep.subr.bf16.mxu0 0
  %241 = vmatpush1.bf16.xpose.msra.mxu0 0
  %242 = vmatprep.subr.bf16.mxu0 0
  %243 = vmatpush1.bf16.xpose.msra.mxu0 0
  %244 = vmatprep.subr.bf16.mxu0 0
  %245 = vmatpush1.bf16.xpose.msra.mxu0 0
  %246 = vmatprep.subr.bf16.mxu0 0
  %247 = vmatpush1.bf16.xpose.msra.mxu0 0
  %248 = vmatprep.subr.bf16.mxu0 0
  %249 = vmatpush1.bf16.xpose.msra.mxu0 0
  %250 = vmatprep.mubr.bf16.mxu0 0
  %251 = vmatmul.mubr.bf16.gmra.mrb[0].mxu0 %v213
  %v252 = vpop.f32.mrb[0].mxu0
  %v253 = vadd.f32 0.0, %v252
  %v254 = vpop.f32.mrb[0].mxu0
  %v255 = vpop.f32.mrb[0].mxu0
  %v256 = vadd.f32 0.0, %v255
  %v257 = vpop.f32.mrb[0].mxu0
  %258 = vdwg.mxu0
  %v259 = vmul.f32 %v253, 0.35355338
  %v260 = vmul.f32 %v256, 0.35355338
  %v261 = vadd.f32 %v259, %v63
  %v262 = vadd.f32 %v260, %v64
  %vm263 = vcmask 130048
  %v264 = vsel %vm263, %v261, -inf
  %265 = vmax.xlane.f32.xlu0 %v264
  %v266 = vpop.xlane.xlu0 %265
  %v267 = vsel %vm263, %v262, -inf
  %268 = vmax.xlane.f32.xlu0 %v267
  %v269 = vpop.xlane.xlu0 %268
  %v270 = vsub.f32 %v261, %v266
  %v271 = vsub.f32 %v262, %v269
  %v272 = vmul.f32 %v270, 1.442695
  %v273 = vpow.pop %v272
  %v274 = vmul.f32 %v271, 1.442695
  %v275 = vpow.pop %v274
  %v276 = vsel %vm263, %v273, 0.0
  %277 = vadd.xlane.f32.xlu0 %v276
  %v278 = vpop.xlane.xlu0 %277
  %v279 = vsel %vm263, %v275, 0.0
  %280 = vadd.xlane.f32.xlu0 %v279
  %v281 = vpop.xlane.xlu0 %280
  %v282 = vrcp.pop %v278
  %v283 = vrcp.pop %v281
  %v284 = vmul.f32 %v273, %v282
  %v285 = vmul.f32 %v275, %v283
  %v286 = vpack.c.bf16 %v285, %v284
  %287 = vrot.lane.b32.xlu0 %v207, 64
  %v288 = vpop.permute.xlu0 %287
  %v291 = vsel %vm263, %v286, 0
  %293 = vmatprep.subr.bf16.mxu0 0
  %294 = vmatpush1.bf16.msra.mxu0 %v288
  %295 = vmatprep.subr.bf16.mxu0 0
  %296 = vmatpush1.bf16.msra.mxu0 0
  %297 = vmatprep.subr.bf16.mxu0 0
  %298 = vmatpush1.bf16.msra.mxu0 0
  %299 = vmatprep.subr.bf16.mxu0 0
  %300 = vmatpush1.bf16.msra.mxu0 0
  %301 = vmatprep.subr.bf16.mxu0 0
  %302 = vmatpush1.bf16.msra.mxu0 0
  %303 = vmatprep.subr.bf16.mxu0 0
  %304 = vmatpush1.bf16.msra.mxu0 0
  %305 = vmatprep.subr.bf16.mxu0 0
  %306 = vmatpush1.bf16.msra.mxu0 0
  %307 = vmatprep.subr.bf16.mxu0 0
  %308 = vmatpush1.bf16.msra.mxu0 0
  %309 = vmatprep.subr.bf16.mxu0 0
  %310 = vmatpush1.bf16.msra.mxu0 0
  %311 = vmatprep.subr.bf16.mxu0 0
  %312 = vmatpush1.bf16.msra.mxu0 0
  %313 = vmatprep.subr.bf16.mxu0 0
  %314 = vmatpush1.bf16.msra.mxu0 0
  %315 = vmatprep.subr.bf16.mxu0 0
  %316 = vmatpush1.bf16.msra.mxu0 0
  %317 = vmatprep.subr.bf16.mxu0 0
  %318 = vmatpush1.bf16.msra.mxu0 0
  %319 = vmatprep.subr.bf16.mxu0 0
  %320 = vmatpush1.bf16.msra.mxu0 0
  %321 = vmatprep.subr.bf16.mxu0 0
  %322 = vmatpush1.bf16.msra.mxu0 0
  %323 = vmatprep.subr.bf16.mxu0 0
  %324 = vmatpush1.bf16.msra.mxu0 0
  %325 = vmatprep.mubr.bf16.mxu0 0
  %326 = vmatmul.mubr.bf16.gmra.mrb[0].mxu0 %v291
  %v327 = vpop.f32.mrb[0].mxu0
  %v328 = vadd.f32 0.0, %v327
  %v329 = vpop.f32.mrb[0].mxu0
  %v330 = vpop.f32.mrb[0].mxu0
  %v331 = vadd.f32 0.0, %v330
  %v332 = vpop.f32.mrb[0].mxu0
  %333 = vdwg.mxu0
  %v334 = vmul.f32 %v328, %v71
  %v335 = vmul.f32 %v331, %v71
  %v336 = vmul.bf16 %v207, %v78
  %v338 = vsel %vm95, %v336, 0
  %340 = vmatprep.subr.bf16.mxu0 0
  %341 = vmatpush1.bf16.xpose.msra.mxu0 %v216
  %342 = vmatprep.subr.bf16.mxu0 0
  %343 = vmatpush1.bf16.xpose.msra.mxu0 0
  %344 = vmatprep.subr.bf16.mxu0 0
  %345 = vmatpush1.bf16.xpose.msra.mxu0 0
  %346 = vmatprep.subr.bf16.mxu0 0
  %347 = vmatpush1.bf16.xpose.msra.mxu0 0
  %348 = vmatprep.subr.bf16.mxu0 0
  %349 = vmatpush1.bf16.xpose.msra.mxu0 0
  %350 = vmatprep.subr.bf16.mxu0 0
  %351 = vmatpush1.bf16.xpose.msra.mxu0 0
  %352 = vmatprep.subr.bf16.mxu0 0
  %353 = vmatpush1.bf16.xpose.msra.mxu0 0
  %354 = vmatprep.subr.bf16.mxu0 0
  %355 = vmatpush1.bf16.xpose.msra.mxu0 0
  %356 = vmatprep.subr.bf16.mxu0 0
  %357 = vmatpush1.bf16.xpose.msra.mxu0 0
  %358 = vmatprep.subr.bf16.mxu0 0
  %359 = vmatpush1.bf16.xpose.msra.mxu0 0
  %360 = vmatprep.subr.bf16.mxu0 0
  %361 = vmatpush1.bf16.xpose.msra.mxu0 0
  %362 = vmatprep.subr.bf16.mxu0 0
  %363 = vmatpush1.bf16.xpose.msra.mxu0 0
  %364 = vmatprep.subr.bf16.mxu0 0
  %365 = vmatpush1.bf16.xpose.msra.mxu0 0
  %366 = vmatprep.subr.bf16.mxu0 0
  %367 = vmatpush1.bf16.xpose.msra.mxu0 0
  %368 = vmatprep.subr.bf16.mxu0 0
  %369 = vmatpush1.bf16.xpose.msra.mxu0 0
  %370 = vmatprep.subr.bf16.mxu0 0
  %371 = vmatpush1.bf16.xpose.msra.mxu0 0
  %372 = vmatprep.mubr.bf16.mxu0 0
  %373 = vmatmul.mubr.bf16.gmra.mrb[0].mxu0 %v338
  %v374 = vpop.f32.mrb[0].mxu0
  %v375 = vadd.f32 0.0, %v374
  %v376 = vpop.f32.mrb[0].mxu0
  %v377 = vpop.f32.mrb[0].mxu0
  %v378 = vadd.f32 0.0, %v377
  %v379 = vpop.f32.mrb[0].mxu0
  %380 = vdwg.mxu0
  %v381 = vmul.f32 %v375, 0.35355338
  %v382 = vmul.f32 %v378, 0.35355338
  %v383 = vadd.f32 %v381, %v63
  %v384 = vadd.f32 %v382, %v64
  %v385 = vsel %vm263, %v383, -inf
  %386 = vmax.xlane.f32.xlu0 %v385
  %v387 = vpop.xlane.xlu0 %386
  %v388 = vsel %vm263, %v384, -inf
  %389 = vmax.xlane.f32.xlu0 %v388
  %v390 = vpop.xlane.xlu0 %389
  %v391 = vsub.f32 %v383, %v387
  %v392 = vsub.f32 %v384, %v390
  %v393 = vmul.f32 %v391, 1.442695
  %v394 = vpow.pop %v393
  %v395 = vmul.f32 %v392, 1.442695
  %v396 = vpow.pop %v395
  %v397 = vsel %vm263, %v394, 0.0
  %398 = vadd.xlane.f32.xlu0 %v397
  %v399 = vpop.xlane.xlu0 %398
  %v400 = vsel %vm263, %v396, 0.0
  %401 = vadd.xlane.f32.xlu0 %v400
  %v402 = vpop.xlane.xlu0 %401
  %v403 = vrcp.pop %v399
  %v404 = vrcp.pop %v402
  %v405 = vmul.f32 %v394, %v403
  %v406 = vmul.f32 %v396, %v404
  %v407 = vpack.c.bf16 %v406, %v405
  %v409 = vsel %vm263, %v407, 0
  %411 = vmatprep.subr.bf16.mxu0 0
  %412 = vmatpush1.bf16.msra.mxu0 %v288
  %413 = vmatprep.subr.bf16.mxu0 0
  %414 = vmatpush1.bf16.msra.mxu0 0
  %415 = vmatprep.subr.bf16.mxu0 0
  %416 = vmatpush1.bf16.msra.mxu0 0
  %417 = vmatprep.subr.bf16.mxu0 0
  %418 = vmatpush1.bf16.msra.mxu0 0
  %419 = vmatprep.subr.bf16.mxu0 0
  %420 = vmatpush1.bf16.msra.mxu0 0
  %421 = vmatprep.subr.bf16.mxu0 0
  %422 = vmatpush1.bf16.msra.mxu0 0
  %423 = vmatprep.subr.bf16.mxu0 0
  %424 = vmatpush1.bf16.msra.mxu0 0
  %425 = vmatprep.subr.bf16.mxu0 0
  %426 = vmatpush1.bf16.msra.mxu0 0
  %427 = vmatprep.subr.bf16.mxu0 0
  %428 = vmatpush1.bf16.msra.mxu0 0
  %429 = vmatprep.subr.bf16.mxu0 0
  %430 = vmatpush1.bf16.msra.mxu0 0
  %431 = vmatprep.subr.bf16.mxu0 0
  %432 = vmatpush1.bf16.msra.mxu0 0
  %433 = vmatprep.subr.bf16.mxu0 0
  %434 = vmatpush1.bf16.msra.mxu0 0
  %435 = vmatprep.subr.bf16.mxu0 0
  %436 = vmatpush1.bf16.msra.mxu0 0
  %437 = vmatprep.subr.bf16.mxu0 0
  %438 = vmatpush1.bf16.msra.mxu0 0
  %439 = vmatprep.subr.bf16.mxu0 0
  %440 = vmatpush1.bf16.msra.mxu0 0
  %441 = vmatprep.subr.bf16.mxu0 0
  %442 = vmatpush1.bf16.msra.mxu0 0
  %443 = vmatprep.mubr.bf16.mxu0 0
  %444 = vmatmul.mubr.bf16.gmra.mrb[0].mxu0 %v409
  %v445 = vpop.f32.mrb[0].mxu0
  %v446 = vadd.f32 0.0, %v445
  %v447 = vpop.f32.mrb[0].mxu0
  %v448 = vpop.f32.mrb[0].mxu0
  %v449 = vadd.f32 0.0, %v448
  %v450 = vpop.f32.mrb[0].mxu0
  %451 = vdwg.mxu0
  %v452 = vmul.f32 %v446, %v77
  %v453 = vmul.f32 %v449, %v77
  %v454 = vadd.f32 %v334, %v452
  %v455 = vadd.f32 %v335, %v453
  %v456 = vmul.bf16 %v207, %v84
  %v458 = vsel %vm95, %v456, 0
  %460 = vmatprep.subr.bf16.mxu0 0
  %461 = vmatpush1.bf16.xpose.msra.mxu0 %v216
  %462 = vmatprep.subr.bf16.mxu0 0
  %463 = vmatpush1.bf16.xpose.msra.mxu0 0
  %464 = vmatprep.subr.bf16.mxu0 0
  %465 = vmatpush1.bf16.xpose.msra.mxu0 0
  %466 = vmatprep.subr.bf16.mxu0 0
  %467 = vmatpush1.bf16.xpose.msra.mxu0 0
  %468 = vmatprep.subr.bf16.mxu0 0
  %469 = vmatpush1.bf16.xpose.msra.mxu0 0
  %470 = vmatprep.subr.bf16.mxu0 0
  %471 = vmatpush1.bf16.xpose.msra.mxu0 0
  %472 = vmatprep.subr.bf16.mxu0 0
  %473 = vmatpush1.bf16.xpose.msra.mxu0 0
  %474 = vmatprep.subr.bf16.mxu0 0
  %475 = vmatpush1.bf16.xpose.msra.mxu0 0
  %476 = vmatprep.subr.bf16.mxu0 0
  %477 = vmatpush1.bf16.xpose.msra.mxu0 0
  %478 = vmatprep.subr.bf16.mxu0 0
  %479 = vmatpush1.bf16.xpose.msra.mxu0 0
  %480 = vmatprep.subr.bf16.mxu0 0
  %481 = vmatpush1.bf16.xpose.msra.mxu0 0
  %482 = vmatprep.subr.bf16.mxu0 0
  %483 = vmatpush1.bf16.xpose.msra.mxu0 0
  %484 = vmatprep.subr.bf16.mxu0 0
  %485 = vmatpush1.bf16.xpose.msra.mxu0 0
  %486 = vmatprep.subr.bf16.mxu0 0
  %487 = vmatpush1.bf16.xpose.msra.mxu0 0
  %488 = vmatprep.subr.bf16.mxu0 0
  %489 = vmatpush1.bf16.xpose.msra.mxu0 0
  %490 = vmatprep.subr.bf16.mxu0 0
  %491 = vmatpush1.bf16.xpose.msra.mxu0 0
  %492 = vmatprep.mubr.bf16.mxu0 0
  %493 = vmatmul.mubr.bf16.gmra.mrb[0].mxu0 %v458
  %v494 = vpop.f32.mrb[0].mxu0
  %v495 = vadd.f32 0.0, %v494
  %v496 = vpop.f32.mrb[0].mxu0
  %v497 = vpop.f32.mrb[0].mxu0
  %v498 = vadd.f32 0.0, %v497
  %v499 = vpop.f32.mrb[0].mxu0
  %500 = vdwg.mxu0
  %v501 = vmul.f32 %v495, 0.35355338
  %v502 = vmul.f32 %v498, 0.35355338
  %v503 = vadd.f32 %v501, %v63
  %v504 = vadd.f32 %v502, %v64
  %v505 = vsel %vm263, %v503, -inf
  %506 = vmax.xlane.f32.xlu0 %v505
  %v507 = vpop.xlane.xlu0 %506
  %v508 = vsel %vm263, %v504, -inf
  %509 = vmax.xlane.f32.xlu0 %v508
  %v510 = vpop.xlane.xlu0 %509
  %v511 = vsub.f32 %v503, %v507
  %v512 = vsub.f32 %v504, %v510
  %v513 = vmul.f32 %v511, 1.442695
  %v514 = vpow.pop %v513
  %v515 = vmul.f32 %v512, 1.442695
  %v516 = vpow.pop %v515
  %v517 = vsel %vm263, %v514, 0.0
  %518 = vadd.xlane.f32.xlu0 %v517
  %v519 = vpop.xlane.xlu0 %518
  %v520 = vsel %vm263, %v516, 0.0
  %521 = vadd.xlane.f32.xlu0 %v520
  %v522 = vpop.xlane.xlu0 %521
  %v523 = vrcp.pop %v519
  %v524 = vrcp.pop %v522
  %v525 = vmul.f32 %v514, %v523
  %v526 = vmul.f32 %v516, %v524
  %v527 = vpack.c.bf16 %v526, %v525
  %v529 = vsel %vm263, %v527, 0
  %531 = vmatprep.subr.bf16.mxu0 0
  %532 = vmatpush1.bf16.msra.mxu0 %v288
  %533 = vmatprep.subr.bf16.mxu0 0
  %534 = vmatpush1.bf16.msra.mxu0 0
  %535 = vmatprep.subr.bf16.mxu0 0
  %536 = vmatpush1.bf16.msra.mxu0 0
  %537 = vmatprep.subr.bf16.mxu0 0
  %538 = vmatpush1.bf16.msra.mxu0 0
  %539 = vmatprep.subr.bf16.mxu0 0
  %540 = vmatpush1.bf16.msra.mxu0 0
  %541 = vmatprep.subr.bf16.mxu0 0
  %542 = vmatpush1.bf16.msra.mxu0 0
  %543 = vmatprep.subr.bf16.mxu0 0
  %544 = vmatpush1.bf16.msra.mxu0 0
  %545 = vmatprep.subr.bf16.mxu0 0
  %546 = vmatpush1.bf16.msra.mxu0 0
  %547 = vmatprep.subr.bf16.mxu0 0
  %548 = vmatpush1.bf16.msra.mxu0 0
  %549 = vmatprep.subr.bf16.mxu0 0
  %550 = vmatpush1.bf16.msra.mxu0 0
  %551 = vmatprep.subr.bf16.mxu0 0
  %552 = vmatpush1.bf16.msra.mxu0 0
  %553 = vmatprep.subr.bf16.mxu0 0
  %554 = vmatpush1.bf16.msra.mxu0 0
  %555 = vmatprep.subr.bf16.mxu0 0
  %556 = vmatpush1.bf16.msra.mxu0 0
  %557 = vmatprep.subr.bf16.mxu0 0
  %558 = vmatpush1.bf16.msra.mxu0 0
  %559 = vmatprep.subr.bf16.mxu0 0
  %560 = vmatpush1.bf16.msra.mxu0 0
  %561 = vmatprep.subr.bf16.mxu0 0
  %562 = vmatpush1.bf16.msra.mxu0 0
  %563 = vmatprep.mubr.bf16.mxu0 0
  %564 = vmatmul.mubr.bf16.gmra.mrb[0].mxu0 %v529
  %v565 = vpop.f32.mrb[0].mxu0
  %v566 = vadd.f32 0.0, %v565
  %v567 = vpop.f32.mrb[0].mxu0
  %v568 = vpop.f32.mrb[0].mxu0
  %v569 = vadd.f32 0.0, %v568
  %v570 = vpop.f32.mrb[0].mxu0
  %571 = vdwg.mxu0
  %v572 = vmul.f32 %v566, %v83
  %v573 = vmul.f32 %v569, %v83
  %v574 = vadd.f32 %v454, %v572
  %v575 = vadd.f32 %v455, %v573
  %v576 = vmul.bf16 %v207, %v90
  %v578 = vsel %vm95, %v576, 0
  %580 = vmatprep.subr.bf16.mxu0 0
  %581 = vmatpush1.bf16.xpose.msra.mxu0 %v216
  %582 = vmatprep.subr.bf16.mxu0 0
  %583 = vmatpush1.bf16.xpose.msra.mxu0 0
  %584 = vmatprep.subr.bf16.mxu0 0
  %585 = vmatpush1.bf16.xpose.msra.mxu0 0
  %586 = vmatprep.subr.bf16.mxu0 0
  %587 = vmatpush1.bf16.xpose.msra.mxu0 0
  %588 = vmatprep.subr.bf16.mxu0 0
  %589 = vmatpush1.bf16.xpose.msra.mxu0 0
  %590 = vmatprep.subr.bf16.mxu0 0
  %591 = vmatpush1.bf16.xpose.msra.mxu0 0
  %592 = vmatprep.subr.bf16.mxu0 0
  %593 = vmatpush1.bf16.xpose.msra.mxu0 0
  %594 = vmatprep.subr.bf16.mxu0 0
  %595 = vmatpush1.bf16.xpose.msra.mxu0 0
  %596 = vmatprep.subr.bf16.mxu0 0
  %597 = vmatpush1.bf16.xpose.msra.mxu0 0
  %598 = vmatprep.subr.bf16.mxu0 0
  %599 = vmatpush1.bf16.xpose.msra.mxu0 0
  %600 = vmatprep.subr.bf16.mxu0 0
  %601 = vmatpush1.bf16.xpose.msra.mxu0 0
  %602 = vmatprep.subr.bf16.mxu0 0
  %603 = vmatpush1.bf16.xpose.msra.mxu0 0
  %604 = vmatprep.subr.bf16.mxu0 0
  %605 = vmatpush1.bf16.xpose.msra.mxu0 0
  %606 = vmatprep.subr.bf16.mxu0 0
  %607 = vmatpush1.bf16.xpose.msra.mxu0 0
  %608 = vmatprep.subr.bf16.mxu0 0
  %609 = vmatpush1.bf16.xpose.msra.mxu0 0
  %610 = vmatprep.subr.bf16.mxu0 0
  %611 = vmatpush1.bf16.xpose.msra.mxu0 0
  %612 = vmatprep.mubr.bf16.mxu0 0
  %613 = vmatmul.mubr.bf16.gmra.mrb[0].mxu0 %v578
  %v614 = vpop.f32.mrb[0].mxu0
  %v615 = vadd.f32 0.0, %v614
  %v616 = vpop.f32.mrb[0].mxu0
  %v617 = vpop.f32.mrb[0].mxu0
  %v618 = vadd.f32 0.0, %v617
  %v619 = vpop.f32.mrb[0].mxu0
  %620 = vdwg.mxu0
  %v621 = vmul.f32 %v615, 0.35355338
  %v622 = vmul.f32 %v618, 0.35355338
  %v623 = vadd.f32 %v621, %v63
  %v624 = vadd.f32 %v622, %v64
  %v625 = vsel %vm263, %v623, -inf
  %626 = vmax.xlane.f32.xlu0 %v625
  %v627 = vpop.xlane.xlu0 %626
  %v628 = vsel %vm263, %v624, -inf
  %629 = vmax.xlane.f32.xlu0 %v628
  %v630 = vpop.xlane.xlu0 %629
  %v631 = vsub.f32 %v623, %v627
  %v632 = vsub.f32 %v624, %v630
  %v633 = vmul.f32 %v631, 1.442695
  %v634 = vpow.pop %v633
  %v635 = vmul.f32 %v632, 1.442695
  %v636 = vpow.pop %v635
  %v637 = vsel %vm263, %v634, 0.0
  %638 = vadd.xlane.f32.xlu0 %v637
  %v639 = vpop.xlane.xlu0 %638
  %v640 = vsel %vm263, %v636, 0.0
  %641 = vadd.xlane.f32.xlu0 %v640
  %v642 = vpop.xlane.xlu0 %641
  %v643 = vrcp.pop %v639
  %v644 = vrcp.pop %v642
  %v645 = vmul.f32 %v634, %v643
  %v646 = vmul.f32 %v636, %v644
  %v647 = vpack.c.bf16 %v646, %v645
  %v649 = vsel %vm263, %v647, 0
  %651 = vmatprep.subr.bf16.mxu0 0
  %652 = vmatpush1.bf16.msra.mxu0 %v288
  %653 = vmatprep.subr.bf16.mxu0 0
  %654 = vmatpush1.bf16.msra.mxu0 0
  %655 = vmatprep.subr.bf16.mxu0 0
  %656 = vmatpush1.bf16.msra.mxu0 0
  %657 = vmatprep.subr.bf16.mxu0 0
  %658 = vmatpush1.bf16.msra.mxu0 0
  %659 = vmatprep.subr.bf16.mxu0 0
  %660 = vmatpush1.bf16.msra.mxu0 0
  %661 = vmatprep.subr.bf16.mxu0 0
  %662 = vmatpush1.bf16.msra.mxu0 0
  %663 = vmatprep.subr.bf16.mxu0 0
  %664 = vmatpush1.bf16.msra.mxu0 0
  %665 = vmatprep.subr.bf16.mxu0 0
  %666 = vmatpush1.bf16.msra.mxu0 0
  %667 = vmatprep.subr.bf16.mxu0 0
  %668 = vmatpush1.bf16.msra.mxu0 0
  %669 = vmatprep.subr.bf16.mxu0 0
  %670 = vmatpush1.bf16.msra.mxu0 0
  %671 = vmatprep.subr.bf16.mxu0 0
  %672 = vmatpush1.bf16.msra.mxu0 0
  %673 = vmatprep.subr.bf16.mxu0 0
  %674 = vmatpush1.bf16.msra.mxu0 0
  %675 = vmatprep.subr.bf16.mxu0 0
  %676 = vmatpush1.bf16.msra.mxu0 0
  %677 = vmatprep.subr.bf16.mxu0 0
  %678 = vmatpush1.bf16.msra.mxu0 0
  %679 = vmatprep.subr.bf16.mxu0 0
  %680 = vmatpush1.bf16.msra.mxu0 0
  %681 = vmatprep.subr.bf16.mxu0 0
  %682 = vmatpush1.bf16.msra.mxu0 0
  %683 = vmatprep.mubr.bf16.mxu0 0
  %684 = vmatmul.mubr.bf16.gmra.mrb[0].mxu0 %v649
  %v685 = vpop.f32.mrb[0].mxu0
  %v686 = vadd.f32 0.0, %v685
  %v687 = vpop.f32.mrb[0].mxu0
  %v688 = vpop.f32.mrb[0].mxu0
  %v689 = vadd.f32 0.0, %v688
  %v690 = vpop.f32.mrb[0].mxu0
  %691 = vdwg.mxu0
  %v692 = vmul.f32 %v686, %v89
  %v693 = vmul.f32 %v689, %v89
  %v694 = vadd.f32 %v574, %v692
  %v695 = vadd.f32 %v575, %v693
  %v696 = vpack.c.bf16 %v695, %v694
  %v697 = vld [vmem:[%s7] sm:$0xf]
  %v698 = vld [vmem:[%s7 + $0x4] sm:$0xf]
  %v699 = vld [vmem:[%s7 + $0x8] sm:$0xf]
  %v700 = vld [vmem:[%s7 + $0xc] sm:$0xf]
  %v701 = vld [vmem:[%s8] sm:$0x1]
  %v703 = vlaneseq
  %v704 = vshrl.u32 %v703, 7
  %v705 = vsub.s32 0, %v704
  %v706 = vrot.slane %v701, %v705
  %v712 = vunpack.c.l.b16 %v697
  %v713 = vunpack.c.l.b16 %v698
  %v714 = vunpack.c.l.b16 %v699
  %v715 = vunpack.c.l.b16 %v700
  %v716 = vpack.c.b16 %v713, %v712
  %v717 = vpack.c.b16 %v715, %v714
  %v721 = vsel %vm95, %v696, 0
  %723 = vmatprep.subr.bf16.mxu0 0
  %724 = vmatpush1.bf16.msra.mxu0 %v716
  %725 = vmatprep.subr.bf16.mxu0 0
  %726 = vmatpush1.bf16.msra.mxu0 %v717
  %727 = vmatprep.subr.bf16.mxu0 0
  %728 = vmatpush1.bf16.msra.mxu0 0
  %729 = vmatprep.subr.bf16.mxu0 0
  %730 = vmatpush1.bf16.msra.mxu0 0
  %731 = vmatprep.subr.bf16.mxu0 0
  %732 = vmatpush1.bf16.msra.mxu0 0
  %733 = vmatprep.subr.bf16.mxu0 0
  %734 = vmatpush1.bf16.msra.mxu0 0
  %735 = vmatprep.subr.bf16.mxu0 0
  %736 = vmatpush1.bf16.msra.mxu0 0
  %737 = vmatprep.subr.bf16.mxu0 0
  %738 = vmatpush1.bf16.msra.mxu0 0
  %739 = vmatprep.subr.bf16.mxu0 0
  %740 = vmatpush1.bf16.msra.mxu0 0
  %741 = vmatprep.subr.bf16.mxu0 0
  %742 = vmatpush1.bf16.msra.mxu0 0
  %743 = vmatprep.subr.bf16.mxu0 0
  %744 = vmatpush1.bf16.msra.mxu0 0
  %745 = vmatprep.subr.bf16.mxu0 0
  %746 = vmatpush1.bf16.msra.mxu0 0
  %747 = vmatprep.subr.bf16.mxu0 0
  %748 = vmatpush1.bf16.msra.mxu0 0
  %749 = vmatprep.subr.bf16.mxu0 0
  %750 = vmatpush1.bf16.msra.mxu0 0
  %751 = vmatprep.subr.bf16.mxu0 0
  %752 = vmatpush1.bf16.msra.mxu0 0
  %753 = vmatprep.subr.bf16.mxu0 0
  %754 = vmatpush1.bf16.msra.mxu0 0
  %755 = vmatprep.mubr.bf16.mxu0 0
  %756 = vmatmul.mubr.bf16.gmra.mrb[0].mxu0 %v721
  %v757 = vpop.f32.mrb[0].mxu0
  %v758 = vadd.f32 %v706, %v757
  %v759 = vpop.f32.mrb[0].mxu0
  %v760 = vpop.f32.mrb[0].mxu0
  %v761 = vadd.f32 %v706, %v760
  %v762 = vpop.f32.mrb[0].mxu0
  %763 = vdwg.mxu0
  %v764 = vadd.f32 %v758, %v137
  %v765 = vadd.f32 %v761, %v138
  %v766 = vld [vmem:[%s9] sm:$0x1]
  %v767 = vld [vmem:[%s10] sm:$0x1]
  %v768 = vsel %vm95, %v764, 0.0
  %769 = vadd.xlane.f32.xlu0 %v768
  %v770 = vpop.xlane.xlu0 %769
  %v771 = vsel %vm95, %v765, 0.0
  %772 = vadd.xlane.f32.xlu0 %v771
  %v773 = vpop.xlane.xlu0 %772
  %v774 = vmul.f32 %v770, %v102
  %v775 = vmul.f32 %v773, %v102
  %v776 = vsub.f32 %v764, %v774
  %v777 = vsub.f32 %v765, %v775
  %v778 = vmul.f32 %v776, %v776
  %v779 = vmul.f32 %v777, %v777
  %v780 = vsel %vm95, %v778, 0.0
  %781 = vadd.xlane.f32.xlu0 %v780
  %v782 = vpop.xlane.xlu0 %781
  %v783 = vsel %vm95, %v779, 0.0
  %784 = vadd.xlane.f32.xlu0 %v783
  %v785 = vpop.xlane.xlu0 %784
  %v786 = vmul.f32 %v782, %v102
  %v787 = vmul.f32 %v785, %v102
  %v788 = vadd.f32 %v786, 1e-12
  %v789 = vadd.f32 %v787, 1e-12
  %v790 = vrsqrt.pop %v788
  %v791 = vrsqrt.pop %v789
  %v792 = vmul.f32 %v776, %v790
  %v793 = vmul.f32 %v777, %v791
  %v795 = vlaneseq
  %v796 = vshrl.u32 %v795, 7
  %v797 = vsub.s32 0, %v796
  %v798 = vrot.slane %v766, %v797
  %v800 = vmul.f32 %v792, %v798
  %v801 = vmul.f32 %v793, %v798
  %v803 = vlaneseq
  %v804 = vshrl.u32 %v803, 7
  %v805 = vsub.s32 0, %v804
  %v806 = vrot.slane %v767, %v805
  %v808 = vadd.f32 %v800, %v806
  %v809 = vadd.f32 %v801, %v806
  %v810 = vpack.c.bf16 %v809, %v808
  %v811 = vld [vmem:[%s11] sm:$0xf]
  %v812 = vld [vmem:[%s11 + $0x4] sm:$0xf]
  %v813 = vld [vmem:[%s11 + $0x8] sm:$0xf]
  %v814 = vld [vmem:[%s11 + $0xc] sm:$0xf]
  %v815 = vld [vmem:[%s12] sm:$0x1]
  %v817 = vlaneseq
  %v818 = vshrl.u32 %v817, 7
  %v819 = vsub.s32 0, %v818
  %v820 = vrot.slane %v815, %v819
  %v826 = vunpack.c.l.b16 %v811
  %v827 = vunpack.c.l.b16 %v812
  %v828 = vunpack.c.l.b16 %v813
  %v829 = vunpack.c.l.b16 %v814
  %v830 = vpack.c.b16 %v827, %v826
  %v831 = vpack.c.b16 %v829, %v828
  %v835 = vsel %vm95, %v810, 0
  %837 = vmatprep.subr.bf16.mxu0 0
  %838 = vmatpush1.bf16.msra.mxu0 %v830
  %839 = vmatprep.subr.bf16.mxu0 0
  %840 = vmatpush1.bf16.msra.mxu0 %v831
  %841 = vmatprep.subr.bf16.mxu0 0
  %842 = vmatpush1.bf16.msra.mxu0 0
  %843 = vmatprep.subr.bf16.mxu0 0
  %844 = vmatpush1.bf16.msra.mxu0 0
  %845 = vmatprep.subr.bf16.mxu0 0
  %846 = vmatpush1.bf16.msra.mxu0 0
  %847 = vmatprep.subr.bf16.mxu0 0
  %848 = vmatpush1.bf16.msra.mxu0 0
  %849 = vmatprep.subr.bf16.mxu0 0
  %850 = vmatpush1.bf16.msra.mxu0 0
  %851 = vmatprep.subr.bf16.mxu0 0
  %852 = vmatpush1.bf16.msra.mxu0 0
  %853 = vmatprep.subr.bf16.mxu0 0
  %854 = vmatpush1.bf16.msra.mxu0 0
  %855 = vmatprep.subr.bf16.mxu0 0
  %856 = vmatpush1.bf16.msra.mxu0 0
  %857 = vmatprep.subr.bf16.mxu0 0
  %858 = vmatpush1.bf16.msra.mxu0 0
  %859 = vmatprep.subr.bf16.mxu0 0
  %860 = vmatpush1.bf16.msra.mxu0 0
  %861 = vmatprep.subr.bf16.mxu0 0
  %862 = vmatpush1.bf16.msra.mxu0 0
  %863 = vmatprep.subr.bf16.mxu0 0
  %864 = vmatpush1.bf16.msra.mxu0 0
  %865 = vmatprep.subr.bf16.mxu0 0
  %866 = vmatpush1.bf16.msra.mxu0 0
  %867 = vmatprep.subr.bf16.mxu0 0
  %868 = vmatpush1.bf16.msra.mxu0 0
  %869 = vmatprep.mubr.bf16.mxu0 0
  %870 = vmatmul.mubr.bf16.gmra.mrb[0].mxu0 %v835
  %v871 = vpop.f32.mrb[0].mxu0
  %v872 = vadd.f32 %v820, %v871
  %v873 = vpop.f32.mrb[0].mxu0
  %v874 = vpop.f32.mrb[0].mxu0
  %v875 = vadd.f32 %v820, %v874
  %v876 = vpop.f32.mrb[0].mxu0
  %877 = vdwg.mxu0
  %v878 = vmul.f32 %v872, %v872
  %v879 = vmul.f32 %v875, %v875
  %v880 = vmul.f32 %v872, %v878
  %v881 = vmul.f32 %v875, %v879
  %v882 = vmul.f32 %v880, 0.044715
  %v883 = vmul.f32 %v881, 0.044715
  %v884 = vadd.f32 %v872, %v882
  %v885 = vadd.f32 %v875, %v883
  %v886 = vmul.f32 %v884, 0.7978846
  %v887 = vmul.f32 %v885, 0.7978846
  %v888 = vtanh.pop %v886
  %v889 = vtanh.pop %v887
  %v890 = vadd.f32 %v888, 1.0
  %v891 = vadd.f32 %v889, 1.0
  %v892 = vmul.f32 %v890, 0.5
  %v893 = vmul.f32 %v891, 0.5
  %v894 = vmul.f32 %v872, %v892
  %v895 = vmul.f32 %v875, %v893
  %v896 = vpack.c.bf16 %v895, %v894
  %v897 = vld [vmem:[%s13] sm:$0xf]
  %v898 = vld [vmem:[%s13 + $0x4] sm:$0xf]
  %v899 = vld [vmem:[%s13 + $0x8] sm:$0xf]
  %v900 = vld [vmem:[%s13 + $0xc] sm:$0xf]
  %v901 = vld [vmem:[%s13 + $0x10] sm:$0xf]
  %v902 = vld [vmem:[%s13 + $0x14] sm:$0xf]
  %v903 = vld [vmem:[%s13 + $0x18] sm:$0xf]
  %v904 = vld [vmem:[%s13 + $0x1c] sm:$0xf]
  %v905 = vld [vmem:[%s14] sm:$0x1]
  %v907 = vlaneseq
  %v908 = vshrl.u32 %v907, 7
  %v909 = vsub.s32 0, %v908
  %v910 = vrot.slane %v905, %v909
  %v920 = vunpack.c.l.b16 %v897
  %v921 = vunpack.c.l.b16 %v898
  %v922 = vunpack.c.l.b16 %v899
  %v923 = vunpack.c.l.b16 %v900
  %v924 = vunpack.c.l.b16 %v901
  %v925 = vunpack.c.l.b16 %v902
  %v926 = vunpack.c.l.b16 %v903
  %v927 = vunpack.c.l.b16 %v904
  %v928 = vpack.c.b16 %v921, %v920
  %v929 = vpack.c.b16 %v923, %v922
  %v930 = vpack.c.b16 %v925, %v924
  %v931 = vpack.c.b16 %v927, %v926
  %vm936 = vcmask 523264
  %v938 = vsel %vm936, %v896, 0
  %940 = vmatprep.subr.bf16.mxu0 0
  %941 = vmatpush1.bf16.msra.mxu0 %v928
  %942 = vmatprep.subr.bf16.mxu0 0
  %943 = vmatpush1.bf16.msra.mxu0 %v929
  %944 = vmatprep.subr.bf16.mxu0 0
  %945 = vmatpush1.bf16.msra.mxu0 %v930
  %946 = vmatprep.subr.bf16.mxu0 0
  %947 = vmatpush1.bf16.msra.mxu0 %v931
  %948 = vmatprep.subr.bf16.mxu0 0
  %949 = vmatpush1.bf16.msra.mxu0 0
  %950 = vmatprep.subr.bf16.mxu0 0
  %951 = vmatpush1.bf16.msra.mxu0 0
  %952 = vmatprep.subr.bf16.mxu0 0
  %953 = vmatpush1.bf16.msra.mxu0 0
  %954 = vmatprep.subr.bf16.mxu0 0
  %955 = vmatpush1.bf16.msra.mxu0 0
  %956 = vmatprep.subr.bf16.mxu0 0
  %957 = vmatpush1.bf16.msra.mxu0 0
  %958 = vmatprep.subr.bf16.mxu0 0
  %959 = vmatpush1.bf16.msra.mxu0 0
  %960 = vmatprep.subr.bf16.mxu0 0
  %961 = vmatpush1.bf16.msra.mxu0 0
  %962 = vmatprep.subr.bf16.mxu0 0
  %963 = vmatpush1.bf16.msra.mxu0 0
  %964 = vmatprep.subr.bf16.mxu0 0
  %965 = vmatpush1.bf16.msra.mxu0 0
  %966 = vmatprep.subr.bf16.mxu0 0
  %967 = vmatpush1.bf16.msra.mxu0 0
  %968 = vmatprep.subr.bf16.mxu0 0
  %969 = vmatpush1.bf16.msra.mxu0 0
  %970 = vmatprep.subr.bf16.mxu0 0
  %971 = vmatpush1.bf16.msra.mxu0 0
  %972 = vmatprep.mubr.bf16.mxu0 0
  %973 = vmatmul.mubr.bf16.gmra.mrb[0].mxu0 %v938
  %v974 = vpop.f32.mrb[0].mxu0
  %v975 = vadd.f32 %v910, %v974
  %v976 = vpop.f32.mrb[0].mxu0
  %v977 = vpop.f32.mrb[0].mxu0
  %v978 = vadd.f32 %v910, %v977
  %v979 = vpop.f32.mrb[0].mxu0
  %980 = vdwg.mxu0
  %v981 = vadd.f32 %v975, %v808
  %v982 = vadd.f32 %v978, %v809
  %v983 = vld [vmem:[%s15] sm:$0x1]
  %v984 = vld [vmem:[%s16] sm:$0x1]
  %v985 = vsel %vm95, %v981, 0.0
  %986 = vadd.xlane.f32.xlu0 %v985
  %v987 = vpop.xlane.xlu0 %986
  %v988 = vsel %vm95, %v982, 0.0
  %989 = vadd.xlane.f32.xlu0 %v988
  %v990 = vpop.xlane.xlu0 %989
  %v991 = vmul.f32 %v987, %v102
  %v992 = vmul.f32 %v990, %v102
  %v993 = vsub.f32 %v981, %v991
  %v994 = vsub.f32 %v982, %v992
  %v995 = vmul.f32 %v993, %v993
  %v996 = vmul.f32 %v994, %v994
  %v997 = vsel %vm95, %v995, 0.0
  %998 = vadd.xlane.f32.xlu0 %v997
  %v999 = vpop.xlane.xlu0 %998
  %v1000 = vsel %vm95, %v996, 0.0
  %1001 = vadd.xlane.f32.xlu0 %v1000
  %v1002 = vpop.xlane.xlu0 %1001
  %v1003 = vmul.f32 %v999, %v102
  %v1004 = vmul.f32 %v1002, %v102
  %v1005 = vadd.f32 %v1003, 1e-12
  %v1006 = vadd.f32 %v1004, 1e-12
  %v1007 = vrsqrt.pop %v1005
  %v1008 = vrsqrt.pop %v1006
  %v1009 = vmul.f32 %v993, %v1007
  %v1010 = vmul.f32 %v994, %v1008
  %v1012 = vlaneseq
  %v1013 = vshrl.u32 %v1012, 7
  %v1014 = vsub.s32 0, %v1013
  %v1015 = vrot.slane %v983, %v1014
  %v1017 = vmul.f32 %v1009, %v1015
  %v1018 = vmul.f32 %v1010, %v1015
  %v1020 = vlaneseq
  %v1021 = vshrl.u32 %v1020, 7
  %v1022 = vsub.s32 0, %v1021
  %v1023 = vrot.slane %v984, %v1022
  %v1025 = vadd.f32 %v1017, %v1023
  %v1026 = vadd.f32 %v1018, %v1023
  %v1027 = vpack.c.bf16 %v1026, %v1025
  %s1028 = scalar_lea.vmem %s5, 16
  %v1029 = vld [vmem:[%s1028] sm:$0xf]
  %v1030 = vld [vmem:[%s1028 + $0x4] sm:$0xf]
  %v1031 = vld [vmem:[%s1028 + $0x8] sm:$0xf]
  %v1032 = vld [vmem:[%s1028 + $0xc] sm:$0xf]
  %s1033 = scalar_lea.vmem %s6, 1
  %v1034 = vld [vmem:[%s1033] sm:$0x1]
  %v1036 = vlaneseq
  %v1037 = vshrl.u32 %v1036, 7
  %v1038 = vsub.s32 0, %v1037
  %v1039 = vrot.slane %v1034, %v1038
  %v1045 = vunpack.c.l.b16 %v1029
  %v1046 = vunpack.c.l.b16 %v1030
  %v1047 = vunpack.c.l.b16 %v1031
  %v1048 = vunpack.c.l.b16 %v1032
  %v1049 = vpack.c.b16 %v1046, %v1045
  %v1050 = vpack.c.b16 %v1048, %v1047
  %v1054 = vsel %vm95, %v1027, 0
  %1056 = vmatprep.subr.bf16.mxu0 0
  %1057 = vmatpush1.bf16.msra.mxu0 %v1049
  %1058 = vmatprep.subr.bf16.mxu0 0
  %1059 = vmatpush1.bf16.msra.mxu0 %v1050
  %1060 = vmatprep.subr.bf16.mxu0 0
  %1061 = vmatpush1.bf16.msra.mxu0 0
  %1062 = vmatprep.subr.bf16.mxu0 0
  %1063 = vmatpush1.bf16.msra.mxu0 0
  %1064 = vmatprep.subr.bf16.mxu0 0
  %1065 = vmatpush1.bf16.msra.mxu0 0
  %1066 = vmatprep.subr.bf16.mxu0 0
  %1067 = vmatpush1.bf16.msra.mxu0 0
  %1068 = vmatprep.subr.bf16.mxu0 0
  %1069 = vmatpush1.bf16.msra.mxu0 0
  %1070 = vmatprep.subr.bf16.mxu0 0
  %1071 = vmatpush1.bf16.msra.mxu0 0
  %1072 = vmatprep.subr.bf16.mxu0 0
  %1073 = vmatpush1.bf16.msra.mxu0 0
  %1074 = vmatprep.subr.bf16.mxu0 0
  %1075 = vmatpush1.bf16.msra.mxu0 0
  %1076 = vmatprep.subr.bf16.mxu0 0
  %1077 = vmatpush1.bf16.msra.mxu0 0
  %1078 = vmatprep.subr.bf16.mxu0 0
  %1079 = vmatpush1.bf16.msra.mxu0 0
  %1080 = vmatprep.subr.bf16.mxu0 0
  %1081 = vmatpush1.bf16.msra.mxu0 0
  %1082 = vmatprep.subr.bf16.mxu0 0
  %1083 = vmatpush1.bf16.msra.mxu0 0
  %1084 = vmatprep.subr.bf16.mxu0 0
  %1085 = vmatpush1.bf16.msra.mxu0 0
  %1086 = vmatprep.subr.bf16.mxu0 0
  %1087 = vmatpush1.bf16.msra.mxu0 0
  %1088 = vmatprep.mubr.bf16.mxu0 0
  %1089 = vmatmul.mubr.bf16.gmra.mrb[0].mxu0 %v1054
  %v1090 = vpop.f32.mrb[0].mxu0
  %v1091 = vadd.f32 %v1039, %v1090
  %v1092 = vpop.f32.mrb[0].mxu0
  %v1093 = vpop.f32.mrb[0].mxu0
  %v1094 = vadd.f32 %v1039, %v1093
  %v1095 = vpop.f32.mrb[0].mxu0
  %1096 = vdwg.mxu0
  %v1097 = vpack.c.bf16 %v1094, %v1091
  %v1098 = vmul.bf16 %v1097, %v72
  %1100 = vrot.lane.b32.xlu0 %v1097, 96
  %v1101 = vpop.permute.xlu0 %1100
  %v1103 = vsel %vm95, %v1098, 0
  %v1106 = vsel %vm95, %v1101, 0
  %1108 = vmatprep.subr.bf16.mxu0 0
  %1109 = vmatpush1.bf16.xpose.msra.mxu0 %v1106
  %1110 = vmatprep.subr.bf16.mxu0 0
  %1111 = vmatpush1.bf16.xpose.msra.mxu0 0
  %1112 = vmatprep.subr.bf16.mxu0 0
  %1113 = vmatpush1.bf16.xpose.msra.mxu0 0
  %1114 = vmatprep.subr.bf16.mxu0 0
  %1115 = vmatpush1.bf16.xpose.msra.mxu0 0
  %1116 = vmatprep.subr.bf16.mxu0 0
  %1117 = vmatpush1.bf16.xpose.msra.mxu0 0
  %1118 = vmatprep.subr.bf16.mxu0 0
  %1119 = vmatpush1.bf16.xpose.msra.mxu0 0
  %1120 = vmatprep.subr.bf16.mxu0 0
  %1121 = vmatpush1.bf16.xpose.msra.mxu0 0
  %1122 = vmatprep.subr.bf16.mxu0 0
  %1123 = vmatpush1.bf16.xpose.msra.mxu0 0
  %1124 = vmatprep.subr.bf16.mxu0 0
  %1125 = vmatpush1.bf16.xpose.msra.mxu0 0
  %1126 = vmatprep.subr.bf16.mxu0 0
  %1127 = vmatpush1.bf16.xpose.msra.mxu0 0
  %1128 = vmatprep.subr.bf16.mxu0 0
  %1129 = vmatpush1.bf16.xpose.msra.mxu0 0
  %1130 = vmatprep.subr.bf16.mxu0 0
  %1131 = vmatpush1.bf16.xpose.msra.mxu0 0
  %1132 = vmatprep.subr.bf16.mxu0 0
  %1133 = vmatpush1.bf16.xpose.msra.mxu0 0
  %1134 = vmatprep.subr.bf16.mxu0 0
  %1135 = vmatpush1.bf16.xpose.msra.mxu0 0
  %1136 = vmatprep.subr.bf16.mxu0 0
  %1137 = vmatpush1.bf16.xpose.msra.mxu0 0
  %1138 = vmatprep.subr.bf16.mxu0 0
  %1139 = vmatpush1.bf16.xpose.msra.mxu0 0
  %1140 = vmatprep.mubr.bf16.mxu0 0
  %1141 = vmatmul.mubr.bf16.gmra.mrb[0].mxu0 %v1103
  %v1142 = vpop.f32.mrb[0].mxu0
  %v1143 = vadd.f32 0.0, %v1142
  %v1144 = vpop.f32.mrb[0].mxu0
  %v1145 = vpop.f32.mrb[0].mxu0
  %v1146 = vadd.f32 0.0, %v1145
  %v1147 = vpop.f32.mrb[0].mxu0
  %1148 = vdwg.mxu0
  %v1149 = vmul.f32 %v1143, 0.35355338
  %v1150 = vmul.f32 %v1146, 0.35355338
  %v1151 = vadd.f32 %v1149, %v63
  %v1152 = vadd.f32 %v1150, %v64
  %v1153 = vsel %vm263, %v1151, -inf
  %1154 = vmax.xlane.f32.xlu0 %v1153
  %v1155 = vpop.xlane.xlu0 %1154
  %v1156 = vsel %vm263, %v1152, -inf
  %1157 = vmax.xlane.f32.xlu0 %v1156
  %v1158 = vpop.xlane.xlu0 %1157
  %v1159 = vsub.f32 %v1151, %v1155
  %v1160 = vsub.f32 %v1152, %v1158
  %v1161 = vmul.f32 %v1159, 1.442695
  %v1162 = vpow.pop %v1161
  %v1163 = vmul.f32 %v1160, 1.442695
  %v1164 = vpow.pop %v1163
  %v1165 = vsel %vm263, %v1162, 0.0
  %1166 = vadd.xlane.f32.xlu0 %v1165
  %v1167 = vpop.xlane.xlu0 %1166
  %v1168 = vsel %vm263, %v1164, 0.0
  %1169 = vadd.xlane.f32.xlu0 %v1168
  %v1170 = vpop.xlane.xlu0 %1169
  %v1171 = vrcp.pop %v1167
  %v1172 = vrcp.pop %v1170
  %v1173 = vmul.f32 %v1162, %v1171
  %v1174 = vmul.f32 %v1164, %v1172
  %v1175 = vpack.c.bf16 %v1174, %v1173
  %1176 = vrot.lane.b32.xlu0 %v1097, 64
  %v1177 = vpop.permute.xlu0 %1176
  %v1180 = vsel %vm263, %v1175, 0
  %1182 = vmatprep.subr.bf16.mxu0 0
  %1183 = vmatpush1.bf16.msra.mxu0 %v1177
  %1184 = vmatprep.subr.bf16.mxu0 0
  %1185 = vmatpush1.bf16.msra.mxu0 0
  %1186 = vmatprep.subr.bf16.mxu0 0
  %1187 = vmatpush1.bf16.msra.mxu0 0
  %1188 = vmatprep.subr.bf16.mxu0 0
  %1189 = vmatpush1.bf16.msra.mxu0 0
  %1190 = vmatprep.subr.bf16.mxu0 0
  %1191 = vmatpush1.bf16.msra.mxu0 0
  %1192 = vmatprep.subr.bf16.mxu0 0
  %1193 = vmatpush1.bf16.msra.mxu0 0
  %1194 = vmatprep.subr.bf16.mxu0 0
  %1195 = vmatpush1.bf16.msra.mxu0 0
  %1196 = vmatprep.subr.bf16.mxu0 0
  %1197 = vmatpush1.bf16.msra.mxu0 0
  %1198 = vmatprep.subr.bf16.mxu0 0
  %1199 = vmatpush1.bf16.msra.mxu0 0
  %1200 = vmatprep.subr.bf16.mxu0 0
  %1201 = vmatpush1.bf16.msra.mxu0 0
  %1202 = vmatprep.subr.bf16.mxu0 0
  %1203 = vmatpush1.bf16.msra.mxu0 0
  %1204 = vmatprep.subr.bf16.mxu0 0
  %1205 = vmatpush1.bf16.msra.mxu0 0
  %1206 = vmatprep.subr.bf16.mxu0 0
  %1207 = vmatpush1.bf16.msra.mxu0 0
  %1208 = vmatprep.subr.bf16.mxu0 0
  %1209 = vmatpush1.bf16.msra.mxu0 0
  %1210 = vmatprep.subr.bf16.mxu0 0
  %1211 = vmatpush1.bf16.msra.mxu0 0
  %1212 = vmatprep.subr.bf16.mxu0 0
  %1213 = vmatpush1.bf16.msra.mxu0 0
  %1214 = vmatprep.mubr.bf16.mxu0 0
  %1215 = vmatmul.mubr.bf16.gmra.mrb[0].mxu0 %v1180
  %v1216 = vpop.f32.mrb[0].mxu0
  %v1217 = vadd.f32 0.0, %v1216
  %v1218 = vpop.f32.mrb[0].mxu0
  %v1219 = vpop.f32.mrb[0].mxu0
  %v1220 = vadd.f32 0.0, %v1219
  %v1221 = vpop.f32.mrb[0].mxu0
  %1222 = vdwg.mxu0
  %v1223 = vmul.f32 %v1217, %v71
  %v1224 = vmul.f32 %v1220, %v71
  %v1225 = vmul.bf16 %v1097, %v78
  %v1227 = vsel %vm95, %v1225, 0
  %1229 = vmatprep.subr.bf16.mxu0 0
  %1230 = vmatpush1.bf16.xpose.msra.mxu0 %v1106
  %1231 = vmatprep.subr.bf16.mxu0 0
  %1232 = vmatpush1.bf16.xpose.msra.mxu0 0
  %1233 = vmatprep.subr.bf16.mxu0 0
  %1234 = vmatpush1.bf16.xpose.msra.mxu0 0
  %1235 = vmatprep.subr.bf16.mxu0 0
  %1236 = vmatpush1.bf16.xpose.msra.mxu0 0
  %1237 = vmatprep.subr.bf16.mxu0 0
  %1238 = vmatpush1.bf16.xpose.msra.mxu0 0
  %1239 = vmatprep.subr.bf16.mxu0 0
  %1240 = vmatpush1.bf16.xpose.msra.mxu0 0
  %1241 = vmatprep.subr.bf16.mxu0 0
  %1242 = vmatpush1.bf16.xpose.msra.mxu0 0
  %1243 = vmatprep.subr.bf16.mxu0 0
  %1244 = vmatpush1.bf16.xpose.msra.mxu0 0
  %1245 = vmatprep.subr.bf16.mxu0 0
  %1246 = vmatpush1.bf16.xpose.msra.mxu0 0
  %1247 = vmatprep.subr.bf16.mxu0 0
  %1248 = vmatpush1.bf16.xpose.msra.mxu0 0
  %1249 = vmatprep.subr.bf16.mxu0 0
  %1250 = vmatpush1.bf16.xpose.msra.mxu0 0
  %1251 = vmatprep.subr.bf16.mxu0 0
  %1252 = vmatpush1.bf16.xpose.msra.mxu0 0
  %1253 = vmatprep.subr.bf16.mxu0 0
  %1254 = vmatpush1.bf16.xpose.msra.mxu0 0
  %1255 = vmatprep.subr.bf16.mxu0 0
  %1256 = vmatpush1.bf16.xpose.msra.mxu0 0
  %1257 = vmatprep.subr.bf16.mxu0 0
  %1258 = vmatpush1.bf16.xpose.msra.mxu0 0
  %1259 = vmatprep.subr.bf16.mxu0 0
  %1260 = vmatpush1.bf16.xpose.msra.mxu0 0
  %1261 = vmatprep.mubr.bf16.mxu0 0
  %1262 = vmatmul.mubr.bf16.gmra.mrb[0].mxu0 %v1227
  %v1263 = vpop.f32.mrb[0].mxu0
  %v1264 = vadd.f32 0.0, %v1263
  %v1265 = vpop.f32.mrb[0].mxu0
  %v1266 = vpop.f32.mrb[0].mxu0
  %v1267 = vadd.f32 0.0, %v1266
  %v1268 = vpop.f32.mrb[0].mxu0
  %1269 = vdwg.mxu0
  %v1270 = vmul.f32 %v1264, 0.35355338
  %v1271 = vmul.f32 %v1267, 0.35355338
  %v1272 = vadd.f32 %v1270, %v63
  %v1273 = vadd.f32 %v1271, %v64
  %v1274 = vsel %vm263, %v1272, -inf
  %1275 = vmax.xlane.f32.xlu0 %v1274
  %v1276 = vpop.xlane.xlu0 %1275
  %v1277 = vsel %vm263, %v1273, -inf
  %1278 = vmax.xlane.f32.xlu0 %v1277
  %v1279 = vpop.xlane.xlu0 %1278
  %v1280 = vsub.f32 %v1272, %v1276
  %v1281 = vsub.f32 %v1273, %v1279
  %v1282 = vmul.f32 %v1280, 1.442695
  %v1283 = vpow.pop %v1282
  %v1284 = vmul.f32 %v1281, 1.442695
  %v1285 = vpow.pop %v1284
  %v1286 = vsel %vm263, %v1283, 0.0
  %1287 = vadd.xlane.f32.xlu0 %v1286
  %v1288 = vpop.xlane.xlu0 %1287
  %v1289 = vsel %vm263, %v1285, 0.0
  %1290 = vadd.xlane.f32.xlu0 %v1289
  %v1291 = vpop.xlane.xlu0 %1290
  %v1292 = vrcp.pop %v1288
  %v1293 = vrcp.pop %v1291
  %v1294 = vmul.f32 %v1283, %v1292
  %v1295 = vmul.f32 %v1285, %v1293
  %v1296 = vpack.c.bf16 %v1295, %v1294
  %v1298 = vsel %vm263, %v1296, 0
  %1300 = vmatprep.subr.bf16.mxu0 0
  %1301 = vmatpush1.bf16.msra.mxu0 %v1177
  %1302 = vmatprep.subr.bf16.mxu0 0
  %1303 = vmatpush1.bf16.msra.mxu0 0
  %1304 = vmatprep.subr.bf16.mxu0 0
  %1305 = vmatpush1.bf16.msra.mxu0 0
  %1306 = vmatprep.subr.bf16.mxu0 0
  %1307 = vmatpush1.bf16.msra.mxu0 0
  %1308 = vmatprep.subr.bf16.mxu0 0
  %1309 = vmatpush1.bf16.msra.mxu0 0
  %1310 = vmatprep.subr.bf16.mxu0 0
  %1311 = vmatpush1.bf16.msra.mxu0 0
  %1312 = vmatprep.subr.bf16.mxu0 0
  %1313 = vmatpush1.bf16.msra.mxu0 0
  %1314 = vmatprep.subr.bf16.mxu0 0
  %1315 = vmatpush1.bf16.msra.mxu0 0
  %1316 = vmatprep.subr.bf16.mxu0 0
  %1317 = vmatpush1.bf16.msra.mxu0 0
  %1318 = vmatprep.subr.bf16.mxu0 0
  %1319 = vmatpush1.bf16.msra.mxu0 0
  %1320 = vmatprep.subr.bf16.mxu0 0
  %1321 = vmatpush1.bf16.msra.mxu0 0
  %1322 = vmatprep.subr.bf16.mxu0 0
  %1323 = vmatpush1.bf16.msra.mxu0 0
  %1324 = vmatprep.subr.bf16.mxu0 0
  %1325 = vmatpush1.bf16.msra.mxu0 0
  %1326 = vmatprep.subr.bf16.mxu0 0
  %1327 = vmatpush1.bf16.msra.mxu0 0
  %1328 = vmatprep.subr.bf16.mxu0 0
  %1329 = vmatpush1.bf16.msra.mxu0 0
  %1330 = vmatprep.subr.bf16.mxu0 0
  %1331 = vmatpush1.bf16.msra.mxu0 0
  %1332 = vmatprep.mubr.bf16.mxu0 0
  %1333 = vmatmul.mubr.bf16.gmra.mrb[0].mxu0 %v1298
  %v1334 = vpop.f32.mrb[0].mxu0
  %v1335 = vadd.f32 0.0, %v1334
  %v1336 = vpop.f32.mrb[0].mxu0
  %v1337 = vpop.f32.mrb[0].mxu0
  %v1338 = vadd.f32 0.0, %v1337
  %v1339 = vpop.f32.mrb[0].mxu0
  %1340 = vdwg.mxu0
  %v1341 = vmul.f32 %v1335, %v77
  %v1342 = vmul.f32 %v1338, %v77
  %v1343 = vadd.f32 %v1223, %v1341
  %v1344 = vadd.f32 %v1224, %v1342
  %v1345 = vmul.bf16 %v1097, %v84
  %v1347 = vsel %vm95, %v1345, 0
  %1349 = vmatprep.subr.bf16.mxu0 0
  %1350 = vmatpush1.bf16.xpose.msra.mxu0 %v1106
  %1351 = vmatprep.subr.bf16.mxu0 0
  %1352 = vmatpush1.bf16.xpose.msra.mxu0 0
  %1353 = vmatprep.subr.bf16.mxu0 0
  %1354 = vmatpush1.bf16.xpose.msra.mxu0 0
  %1355 = vmatprep.subr.bf16.mxu0 0
  %1356 = vmatpush1.bf16.xpose.msra.mxu0 0
  %1357 = vmatprep.subr.bf16.mxu0 0
  %1358 = vmatpush1.bf16.xpose.msra.mxu0 0
  %1359 = vmatprep.subr.bf16.mxu0 0
  %1360 = vmatpush1.bf16.xpose.msra.mxu0 0
  %1361 = vmatprep.subr.bf16.mxu0 0
  %1362 = vmatpush1.bf16.xpose.msra.mxu0 0
  %1363 = vmatprep.subr.bf16.mxu0 0
  %1364 = vmatpush1.bf16.xpose.msra.mxu0 0
  %1365 = vmatprep.subr.bf16.mxu0 0
  %1366 = vmatpush1.bf16.xpose.msra.mxu0 0
  %1367 = vmatprep.subr.bf16.mxu0 0
  %1368 = vmatpush1.bf16.xpose.msra.mxu0 0
  %1369 = vmatprep.subr.bf16.mxu0 0
  %1370 = vmatpush1.bf16.xpose.msra.mxu0 0
  %1371 = vmatprep.subr.bf16.mxu0 0
  %1372 = vmatpush1.bf16.xpose.msra.mxu0 0
  %1373 = vmatprep.subr.bf16.mxu0 0
  %1374 = vmatpush1.bf16.xpose.msra.mxu0 0
  %1375 = vmatprep.subr.bf16.mxu0 0
  %1376 = vmatpush1.bf16.xpose.msra.mxu0 0
  %1377 = vmatprep.subr.bf16.mxu0 0
  %1378 = vmatpush1.bf16.xpose.msra.mxu0 0
  %1379 = vmatprep.subr.bf16.mxu0 0
  %1380 = vmatpush1.bf16.xpose.msra.mxu0 0
  %1381 = vmatprep.mubr.bf16.mxu0 0
  %1382 = vmatmul.mubr.bf16.gmra.mrb[0].mxu0 %v1347
  %v1383 = vpop.f32.mrb[0].mxu0
  %v1384 = vadd.f32 0.0, %v1383
  %v1385 = vpop.f32.mrb[0].mxu0
  %v1386 = vpop.f32.mrb[0].mxu0
  %v1387 = vadd.f32 0.0, %v1386
  %v1388 = vpop.f32.mrb[0].mxu0
  %1389 = vdwg.mxu0
  %v1390 = vmul.f32 %v1384, 0.35355338
  %v1391 = vmul.f32 %v1387, 0.35355338
  %v1392 = vadd.f32 %v1390, %v63
  %v1393 = vadd.f32 %v1391, %v64
  %v1394 = vsel %vm263, %v1392, -inf
  %1395 = vmax.xlane.f32.xlu0 %v1394
  %v1396 = vpop.xlane.xlu0 %1395
  %v1397 = vsel %vm263, %v1393, -inf
  %1398 = vmax.xlane.f32.xlu0 %v1397
  %v1399 = vpop.xlane.xlu0 %1398
  %v1400 = vsub.f32 %v1392, %v1396
  %v1401 = vsub.f32 %v1393, %v1399
  %v1402 = vmul.f32 %v1400, 1.442695
  %v1403 = vpow.pop %v1402
  %v1404 = vmul.f32 %v1401, 1.442695
  %v1405 = vpow.pop %v1404
  %v1406 = vsel %vm263, %v1403, 0.0
  %1407 = vadd.xlane.f32.xlu0 %v1406
  %v1408 = vpop.xlane.xlu0 %1407
  %v1409 = vsel %vm263, %v1405, 0.0
  %1410 = vadd.xlane.f32.xlu0 %v1409
  %v1411 = vpop.xlane.xlu0 %1410
  %v1412 = vrcp.pop %v1408
  %v1413 = vrcp.pop %v1411
  %v1414 = vmul.f32 %v1403, %v1412
  %v1415 = vmul.f32 %v1405, %v1413
  %v1416 = vpack.c.bf16 %v1415, %v1414
  %v1418 = vsel %vm263, %v1416, 0
  %1420 = vmatprep.subr.bf16.mxu0 0
  %1421 = vmatpush1.bf16.msra.mxu0 %v1177
  %1422 = vmatprep.subr.bf16.mxu0 0
  %1423 = vmatpush1.bf16.msra.mxu0 0
  %1424 = vmatprep.subr.bf16.mxu0 0
  %1425 = vmatpush1.bf16.msra.mxu0 0
  %1426 = vmatprep.subr.bf16.mxu0 0
  %1427 = vmatpush1.bf16.msra.mxu0 0
  %1428 = vmatprep.subr.bf16.mxu0 0
  %1429 = vmatpush1.bf16.msra.mxu0 0
  %1430 = vmatprep.subr.bf16.mxu0 0
  %1431 = vmatpush1.bf16.msra.mxu0 0
  %1432 = vmatprep.subr.bf16.mxu0 0
  %1433 = vmatpush1.bf16.msra.mxu0 0
  %1434 = vmatprep.subr.bf16.mxu0 0
  %1435 = vmatpush1.bf16.msra.mxu0 0
  %1436 = vmatprep.subr.bf16.mxu0 0
  %1437 = vmatpush1.bf16.msra.mxu0 0
  %1438 = vmatprep.subr.bf16.mxu0 0
  %1439 = vmatpush1.bf16.msra.mxu0 0
  %1440 = vmatprep.subr.bf16.mxu0 0
  %1441 = vmatpush1.bf16.msra.mxu0 0
  %1442 = vmatprep.subr.bf16.mxu0 0
  %1443 = vmatpush1.bf16.msra.mxu0 0
  %1444 = vmatprep.subr.bf16.mxu0 0
  %1445 = vmatpush1.bf16.msra.mxu0 0
  %1446 = vmatprep.subr.bf16.mxu0 0
  %1447 = vmatpush1.bf16.msra.mxu0 0
  %1448 = vmatprep.subr.bf16.mxu0 0
  %1449 = vmatpush1.bf16.msra.mxu0 0
  %1450 = vmatprep.subr.bf16.mxu0 0
  %1451 = vmatpush1.bf16.msra.mxu0 0
  %1452 = vmatprep.mubr.bf16.mxu0 0
  %1453 = vmatmul.mubr.bf16.gmra.mrb[0].mxu0 %v1418
  %v1454 = vpop.f32.mrb[0].mxu0
  %v1455 = vadd.f32 0.0, %v1454
  %v1456 = vpop.f32.mrb[0].mxu0
  %v1457 = vpop.f32.mrb[0].mxu0
  %v1458 = vadd.f32 0.0, %v1457
  %v1459 = vpop.f32.mrb[0].mxu0
  %1460 = vdwg.mxu0
  %v1461 = vmul.f32 %v1455, %v83
  %v1462 = vmul.f32 %v1458, %v83
  %v1463 = vadd.f32 %v1343, %v1461
  %v1464 = vadd.f32 %v1344, %v1462
  %v1465 = vmul.bf16 %v1097, %v90
  %v1467 = vsel %vm95, %v1465, 0
  %1469 = vmatprep.subr.bf16.mxu0 0
  %1470 = vmatpush1.bf16.xpose.msra.mxu0 %v1106
  %1471 = vmatprep.subr.bf16.mxu0 0
  %1472 = vmatpush1.bf16.xpose.msra.mxu0 0
  %1473 = vmatprep.subr.bf16.mxu0 0
  %1474 = vmatpush1.bf16.xpose.msra.mxu0 0
  %1475 = vmatprep.subr.bf16.mxu0 0
  %1476 = vmatpush1.bf16.xpose.msra.mxu0 0
  %1477 = vmatprep.subr.bf16.mxu0 0
  %1478 = vmatpush1.bf16.xpose.msra.mxu0 0
  %1479 = vmatprep.subr.bf16.mxu0 0
  %1480 = vmatpush1.bf16.xpose.msra.mxu0 0
  %1481 = vmatprep.subr.bf16.mxu0 0
  %1482 = vmatpush1.bf16.xpose.msra.mxu0 0
  %1483 = vmatprep.subr.bf16.mxu0 0
  %1484 = vmatpush1.bf16.xpose.msra.mxu0 0
  %1485 = vmatprep.subr.bf16.mxu0 0
  %1486 = vmatpush1.bf16.xpose.msra.mxu0 0
  %1487 = vmatprep.subr.bf16.mxu0 0
  %1488 = vmatpush1.bf16.xpose.msra.mxu0 0
  %1489 = vmatprep.subr.bf16.mxu0 0
  %1490 = vmatpush1.bf16.xpose.msra.mxu0 0
  %1491 = vmatprep.subr.bf16.mxu0 0
  %1492 = vmatpush1.bf16.xpose.msra.mxu0 0
  %1493 = vmatprep.subr.bf16.mxu0 0
  %1494 = vmatpush1.bf16.xpose.msra.mxu0 0
  %1495 = vmatprep.subr.bf16.mxu0 0
  %1496 = vmatpush1.bf16.xpose.msra.mxu0 0
  %1497 = vmatprep.subr.bf16.mxu0 0
  %1498 = vmatpush1.bf16.xpose.msra.mxu0 0
  %1499 = vmatprep.subr.bf16.mxu0 0
  %1500 = vmatpush1.bf16.xpose.msra.mxu0 0
  %1501 = vmatprep.mubr.bf16.mxu0 0
  %1502 = vmatmul.mubr.bf16.gmra.mrb[0].mxu0 %v1467
  %v1503 = vpop.f32.mrb[0].mxu0
  %v1504 = vadd.f32 0.0, %v1503
  %v1505 = vpop.f32.mrb[0].mxu0
  %v1506 = vpop.f32.mrb[0].mxu0
  %v1507 = vadd.f32 0.0, %v1506
  %v1508 = vpop.f32.mrb[0].mxu0
  %1509 = vdwg.mxu0
  %v1510 = vmul.f32 %v1504, 0.35355338
  %v1511 = vmul.f32 %v1507, 0.35355338
  %v1512 = vadd.f32 %v1510, %v63
  %v1513 = vadd.f32 %v1511, %v64
  %v1514 = vsel %vm263, %v1512, -inf
  %1515 = vmax.xlane.f32.xlu0 %v1514
  %v1516 = vpop.xlane.xlu0 %1515
  %v1517 = vsel %vm263, %v1513, -inf
  %1518 = vmax.xlane.f32.xlu0 %v1517
  %v1519 = vpop.xlane.xlu0 %1518
  %v1520 = vsub.f32 %v1512, %v1516
  %v1521 = vsub.f32 %v1513, %v1519
  %v1522 = vmul.f32 %v1520, 1.442695
  %v1523 = vpow.pop %v1522
  %v1524 = vmul.f32 %v1521, 1.442695
  %v1525 = vpow.pop %v1524
  %v1526 = vsel %vm263, %v1523, 0.0
  %1527 = vadd.xlane.f32.xlu0 %v1526
  %v1528 = vpop.xlane.xlu0 %1527
  %v1529 = vsel %vm263, %v1525, 0.0
  %1530 = vadd.xlane.f32.xlu0 %v1529
  %v1531 = vpop.xlane.xlu0 %1530
  %v1532 = vrcp.pop %v1528
  %v1533 = vrcp.pop %v1531
  %v1534 = vmul.f32 %v1523, %v1532
  %v1535 = vmul.f32 %v1525, %v1533
  %v1536 = vpack.c.bf16 %v1535, %v1534
  %v1538 = vsel %vm263, %v1536, 0
  %1540 = vmatprep.subr.bf16.mxu0 0
  %1541 = vmatpush1.bf16.msra.mxu0 %v1177
  %1542 = vmatprep.subr.bf16.mxu0 0
  %1543 = vmatpush1.bf16.msra.mxu0 0
  %1544 = vmatprep.subr.bf16.mxu0 0
  %1545 = vmatpush1.bf16.msra.mxu0 0
  %1546 = vmatprep.subr.bf16.mxu0 0
  %1547 = vmatpush1.bf16.msra.mxu0 0
  %1548 = vmatprep.subr.bf16.mxu0 0
  %1549 = vmatpush1.bf16.msra.mxu0 0
  %1550 = vmatprep.subr.bf16.mxu0 0
  %1551 = vmatpush1.bf16.msra.mxu0 0
  %1552 = vmatprep.subr.bf16.mxu0 0
  %1553 = vmatpush1.bf16.msra.mxu0 0
  %1554 = vmatprep.subr.bf16.mxu0 0
  %1555 = vmatpush1.bf16.msra.mxu0 0
  %1556 = vmatprep.subr.bf16.mxu0 0
  %1557 = vmatpush1.bf16.msra.mxu0 0
  %1558 = vmatprep.subr.bf16.mxu0 0
  %1559 = vmatpush1.bf16.msra.mxu0 0
  %1560 = vmatprep.subr.bf16.mxu0 0
  %1561 = vmatpush1.bf16.msra.mxu0 0
  %1562 = vmatprep.subr.bf16.mxu0 0
  %1563 = vmatpush1.bf16.msra.mxu0 0
  %1564 = vmatprep.subr.bf16.mxu0 0
  %1565 = vmatpush1.bf16.msra.mxu0 0
  %1566 = vmatprep.subr.bf16.mxu0 0
  %1567 = vmatpush1.bf16.msra.mxu0 0
  %1568 = vmatprep.subr.bf16.mxu0 0
  %1569 = vmatpush1.bf16.msra.mxu0 0
  %1570 = vmatprep.subr.bf16.mxu0 0
  %1571 = vmatpush1.bf16.msra.mxu0 0
  %1572 = vmatprep.mubr.bf16.mxu0 0
  %1573 = vmatmul.mubr.bf16.gmra.mrb[0].mxu0 %v1538
  %v1574 = vpop.f32.mrb[0].mxu0
  %v1575 = vadd.f32 0.0, %v1574
  %v1576 = vpop.f32.mrb[0].mxu0
  %v1577 = vpop.f32.mrb[0].mxu0
  %v1578 = vadd.f32 0.0, %v1577
  %v1579 = vpop.f32.mrb[0].mxu0
  %1580 = vdwg.mxu0
  %v1581 = vmul.f32 %v1575, %v89
  %v1582 = vmul.f32 %v1578, %v89
  %v1583 = vadd.f32 %v1463, %v1581
  %v1584 = vadd.f32 %v1464, %v1582
  %v1585 = vpack.c.bf16 %v1584, %v1583
  %s1586 = scalar_lea.vmem %s7, 16
  %v1587 = vld [vmem:[%s1586] sm:$0xf]
  %v1588 = vld [vmem:[%s1586 + $0x4] sm:$0xf]
  %v1589 = vld [vmem:[%s1586 + $0x8] sm:$0xf]
  %v1590 = vld [vmem:[%s1586 + $0xc] sm:$0xf]
  %s1591 = scalar_lea.vmem %s8, 1
  %v1592 = vld [vmem:[%s1591] sm:$0x1]
  %v1594 = vlaneseq
  %v1595 = vshrl.u32 %v1594, 7
  %v1596 = vsub.s32 0, %v1595
  %v1597 = vrot.slane %v1592, %v1596
  %v1603 = vunpack.c.l.b16 %v1587
  %v1604 = vunpack.c.l.b16 %v1588
  %v1605 = vunpack.c.l.b16 %v1589
  %v1606 = vunpack.c.l.b16 %v1590
  %v1607 = vpack.c.b16 %v1604, %v1603
  %v1608 = vpack.c.b16 %v1606, %v1605
  %v1612 = vsel %vm95, %v1585, 0
  %1614 = vmatprep.subr.bf16.mxu0 0
  %1615 = vmatpush1.bf16.msra.mxu0 %v1607
  %1616 = vmatprep.subr.bf16.mxu0 0
  %1617 = vmatpush1.bf16.msra.mxu0 %v1608
  %1618 = vmatprep.subr.bf16.mxu0 0
  %1619 = vmatpush1.bf16.msra.mxu0 0
  %1620 = vmatprep.subr.bf16.mxu0 0
  %1621 = vmatpush1.bf16.msra.mxu0 0
  %1622 = vmatprep.subr.bf16.mxu0 0
  %1623 = vmatpush1.bf16.msra.mxu0 0
  %1624 = vmatprep.subr.bf16.mxu0 0
  %1625 = vmatpush1.bf16.msra.mxu0 0
  %1626 = vmatprep.subr.bf16.mxu0 0
  %1627 = vmatpush1.bf16.msra.mxu0 0
  %1628 = vmatprep.subr.bf16.mxu0 0
  %1629 = vmatpush1.bf16.msra.mxu0 0
  %1630 = vmatprep.subr.bf16.mxu0 0
  %1631 = vmatpush1.bf16.msra.mxu0 0
  %1632 = vmatprep.subr.bf16.mxu0 0
  %1633 = vmatpush1.bf16.msra.mxu0 0
  %1634 = vmatprep.subr.bf16.mxu0 0
  %1635 = vmatpush1.bf16.msra.mxu0 0
  %1636 = vmatprep.subr.bf16.mxu0 0
  %1637 = vmatpush1.bf16.msra.mxu0 0
  %1638 = vmatprep.subr.bf16.mxu0 0
  %1639 = vmatpush1.bf16.msra.mxu0 0
  %1640 = vmatprep.subr.bf16.mxu0 0
  %1641 = vmatpush1.bf16.msra.mxu0 0
  %1642 = vmatprep.subr.bf16.mxu0 0
  %1643 = vmatpush1.bf16.msra.mxu0 0
  %1644 = vmatprep.subr.bf16.mxu0 0
  %1645 = vmatpush1.bf16.msra.mxu0 0
  %1646 = vmatprep.mubr.bf16.mxu0 0
  %1647 = vmatmul.mubr.bf16.gmra.mrb[0].mxu0 %v1612
  %v1648 = vpop.f32.mrb[0].mxu0
  %v1649 = vadd.f32 %v1597, %v1648
  %v1650 = vpop.f32.mrb[0].mxu0
  %v1651 = vpop.f32.mrb[0].mxu0
  %v1652 = vadd.f32 %v1597, %v1651
  %v1653 = vpop.f32.mrb[0].mxu0
  %1654 = vdwg.mxu0
  %v1655 = vadd.f32 %v1649, %v1025
  %v1656 = vadd.f32 %v1652, %v1026
  %s1657 = scalar_lea.vmem %s9, 1
  %v1658 = vld [vmem:[%s1657] sm:$0x1]
  %s1659 = scalar_lea.vmem %s10, 1
  %v1660 = vld [vmem:[%s1659] sm:$0x1]
  %v1661 = vsel %vm95, %v1655, 0.0
  %1662 = vadd.xlane.f32.xlu0 %v1661
  %v1663 = vpop.xlane.xlu0 %1662
  %v1664 = vsel %vm95, %v1656, 0.0
  %1665 = vadd.xlane.f32.xlu0 %v1664
  %v1666 = vpop.xlane.xlu0 %1665
  %v1667 = vmul.f32 %v1663, %v102
  %v1668 = vmul.f32 %v1666, %v102
  %v1669 = vsub.f32 %v1655, %v1667
  %v1670 = vsub.f32 %v1656, %v1668
  %v1671 = vmul.f32 %v1669, %v1669
  %v1672 = vmul.f32 %v1670, %v1670
  %v1673 = vsel %vm95, %v1671, 0.0
  %1674 = vadd.xlane.f32.xlu0 %v1673
  %v1675 = vpop.xlane.xlu0 %1674
  %v1676 = vsel %vm95, %v1672, 0.0
  %1677 = vadd.xlane.f32.xlu0 %v1676
  %v1678 = vpop.xlane.xlu0 %1677
  %v1679 = vmul.f32 %v1675, %v102
  %v1680 = vmul.f32 %v1678, %v102
  %v1681 = vadd.f32 %v1679, 1e-12
  %v1682 = vadd.f32 %v1680, 1e-12
  %v1683 = vrsqrt.pop %v1681
  %v1684 = vrsqrt.pop %v1682
  %v1685 = vmul.f32 %v1669, %v1683
  %v1686 = vmul.f32 %v1670, %v1684
  %v1688 = vlaneseq
  %v1689 = vshrl.u32 %v1688, 7
  %v1690 = vsub.s32 0, %v1689
  %v1691 = vrot.slane %v1658, %v1690
  %v1693 = vmul.f32 %v1685, %v1691
  %v1694 = vmul.f32 %v1686, %v1691
  %v1696 = vlaneseq
  %v1697 = vshrl.u32 %v1696, 7
  %v1698 = vsub.s32 0, %v1697
  %v1699 = vrot.slane %v1660, %v1698
  %v1701 = vadd.f32 %v1693, %v1699
  %v1702 = vadd.f32 %v1694, %v1699
  %v1703 = vpack.c.bf16 %v1702, %v1701
  %s1704 = scalar_lea.vmem %s11, 16
  %v1705 = vld [vmem:[%s1704] sm:$0xf]
  %v1706 = vld [vmem:[%s1704 + $0x4] sm:$0xf]
  %v1707 = vld [vmem:[%s1704 + $0x8] sm:$0xf]
  %v1708 = vld [vmem:[%s1704 + $0xc] sm:$0xf]
  %s1709 = scalar_lea.vmem %s12, 1
  %v1710 = vld [vmem:[%s1709] sm:$0x1]
  %v1712 = vlaneseq
  %v1713 = vshrl.u32 %v1712, 7
  %v1714 = vsub.s32 0, %v1713
  %v1715 = vrot.slane %v1710, %v1714
  %v1721 = vunpack.c.l.b16 %v1705
  %v1722 = vunpack.c.l.b16 %v1706
  %v1723 = vunpack.c.l.b16 %v1707
  %v1724 = vunpack.c.l.b16 %v1708
  %v1725 = vpack.c.b16 %v1722, %v1721
  %v1726 = vpack.c.b16 %v1724, %v1723
  %v1730 = vsel %vm95, %v1703, 0
  %1732 = vmatprep.subr.bf16.mxu0 0
  %1733 = vmatpush1.bf16.msra.mxu0 %v1725
  %1734 = vmatprep.subr.bf16.mxu0 0
  %1735 = vmatpush1.bf16.msra.mxu0 %v1726
  %1736 = vmatprep.subr.bf16.mxu0 0
  %1737 = vmatpush1.bf16.msra.mxu0 0
  %1738 = vmatprep.subr.bf16.mxu0 0
  %1739 = vmatpush1.bf16.msra.mxu0 0
  %1740 = vmatprep.subr.bf16.mxu0 0
  %1741 = vmatpush1.bf16.msra.mxu0 0
  %1742 = vmatprep.subr.bf16.mxu0 0
  %1743 = vmatpush1.bf16.msra.mxu0 0
  %1744 = vmatprep.subr.bf16.mxu0 0
  %1745 = vmatpush1.bf16.msra.mxu0 0
  %1746 = vmatprep.subr.bf16.mxu0 0
  %1747 = vmatpush1.bf16.msra.mxu0 0
  %1748 = vmatprep.subr.bf16.mxu0 0
  %1749 = vmatpush1.bf16.msra.mxu0 0
  %1750 = vmatprep.subr.bf16.mxu0 0
  %1751 = vmatpush1.bf16.msra.mxu0 0
  %1752 = vmatprep.subr.bf16.mxu0 0
  %1753 = vmatpush1.bf16.msra.mxu0 0
  %1754 = vmatprep.subr.bf16.mxu0 0
  %1755 = vmatpush1.bf16.msra.mxu0 0
  %1756 = vmatprep.subr.bf16.mxu0 0
  %1757 = vmatpush1.bf16.msra.mxu0 0
  %1758 = vmatprep.subr.bf16.mxu0 0
  %1759 = vmatpush1.bf16.msra.mxu0 0
  %1760 = vmatprep.subr.bf16.mxu0 0
  %1761 = vmatpush1.bf16.msra.mxu0 0
  %1762 = vmatprep.subr.bf16.mxu0 0
  %1763 = vmatpush1.bf16.msra.mxu0 0
  %1764 = vmatprep.mubr.bf16.mxu0 0
  %1765 = vmatmul.mubr.bf16.gmra.mrb[0].mxu0 %v1730
  %v1766 = vpop.f32.mrb[0].mxu0
  %v1767 = vadd.f32 %v1715, %v1766
  %v1768 = vpop.f32.mrb[0].mxu0
  %v1769 = vpop.f32.mrb[0].mxu0
  %v1770 = vadd.f32 %v1715, %v1769
  %v1771 = vpop.f32.mrb[0].mxu0
  %1772 = vdwg.mxu0
  %v1773 = vmul.f32 %v1767, %v1767
  %v1774 = vmul.f32 %v1770, %v1770
  %v1775 = vmul.f32 %v1767, %v1773
  %v1776 = vmul.f32 %v1770, %v1774
  %v1777 = vmul.f32 %v1775, 0.044715
  %v1778 = vmul.f32 %v1776, 0.044715
  %v1779 = vadd.f32 %v1767, %v1777
  %v1780 = vadd.f32 %v1770, %v1778
  %v1781 = vmul.f32 %v1779, 0.7978846
  %v1782 = vmul.f32 %v1780, 0.7978846
  %v1783 = vtanh.pop %v1781
  %v1784 = vtanh.pop %v1782
  %v1785 = vadd.f32 %v1783, 1.0
  %v1786 = vadd.f32 %v1784, 1.0
  %v1787 = vmul.f32 %v1785, 0.5
  %v1788 = vmul.f32 %v1786, 0.5
  %v1789 = vmul.f32 %v1767, %v1787
  %v1790 = vmul.f32 %v1770, %v1788
  %v1791 = vpack.c.bf16 %v1790, %v1789
  %s1792 = scalar_lea.vmem %s13, 32
  %v1793 = vld [vmem:[%s1792] sm:$0xf]
  %v1794 = vld [vmem:[%s1792 + $0x4] sm:$0xf]
  %v1795 = vld [vmem:[%s1792 + $0x8] sm:$0xf]
  %v1796 = vld [vmem:[%s1792 + $0xc] sm:$0xf]
  %v1797 = vld [vmem:[%s1792 + $0x10] sm:$0xf]
  %v1798 = vld [vmem:[%s1792 + $0x14] sm:$0xf]
  %v1799 = vld [vmem:[%s1792 + $0x18] sm:$0xf]
  %v1800 = vld [vmem:[%s1792 + $0x1c] sm:$0xf]
  %s1801 = scalar_lea.vmem %s14, 1
  %v1802 = vld [vmem:[%s1801] sm:$0x1]
  %v1804 = vlaneseq
  %v1805 = vshrl.u32 %v1804, 7
  %v1806 = vsub.s32 0, %v1805
  %v1807 = vrot.slane %v1802, %v1806
  %v1817 = vunpack.c.l.b16 %v1793
  %v1818 = vunpack.c.l.b16 %v1794
  %v1819 = vunpack.c.l.b16 %v1795
  %v1820 = vunpack.c.l.b16 %v1796
  %v1821 = vunpack.c.l.b16 %v1797
  %v1822 = vunpack.c.l.b16 %v1798
  %v1823 = vunpack.c.l.b16 %v1799
  %v1824 = vunpack.c.l.b16 %v1800
  %v1825 = vpack.c.b16 %v1818, %v1817
  %v1826 = vpack.c.b16 %v1820, %v1819
  %v1827 = vpack.c.b16 %v1822, %v1821
  %v1828 = vpack.c.b16 %v1824, %v1823
  %v1834 = vsel %vm936, %v1791, 0
  %1836 = vmatprep.subr.bf16.mxu0 0
  %1837 = vmatpush1.bf16.msra.mxu0 %v1825
  %1838 = vmatprep.subr.bf16.mxu0 0
  %1839 = vmatpush1.bf16.msra.mxu0 %v1826
  %1840 = vmatprep.subr.bf16.mxu0 0
  %1841 = vmatpush1.bf16.msra.mxu0 %v1827
  %1842 = vmatprep.subr.bf16.mxu0 0
  %1843 = vmatpush1.bf16.msra.mxu0 %v1828
  %1844 = vmatprep.subr.bf16.mxu0 0
  %1845 = vmatpush1.bf16.msra.mxu0 0
  %1846 = vmatprep.subr.bf16.mxu0 0
  %1847 = vmatpush1.bf16.msra.mxu0 0
  %1848 = vmatprep.subr.bf16.mxu0 0
  %1849 = vmatpush1.bf16.msra.mxu0 0
  %1850 = vmatprep.subr.bf16.mxu0 0
  %1851 = vmatpush1.bf16.msra.mxu0 0
  %1852 = vmatprep.subr.bf16.mxu0 0
  %1853 = vmatpush1.bf16.msra.mxu0 0
  %1854 = vmatprep.subr.bf16.mxu0 0
  %1855 = vmatpush1.bf16.msra.mxu0 0
  %1856 = vmatprep.subr.bf16.mxu0 0
  %1857 = vmatpush1.bf16.msra.mxu0 0
  %1858 = vmatprep.subr.bf16.mxu0 0
  %1859 = vmatpush1.bf16.msra.mxu0 0
  %1860 = vmatprep.subr.bf16.mxu0 0
  %1861 = vmatpush1.bf16.msra.mxu0 0
  %1862 = vmatprep.subr.bf16.mxu0 0
  %1863 = vmatpush1.bf16.msra.mxu0 0
  %1864 = vmatprep.subr.bf16.mxu0 0
  %1865 = vmatpush1.bf16.msra.mxu0 0
  %1866 = vmatprep.subr.bf16.mxu0 0
  %1867 = vmatpush1.bf16.msra.mxu0 0
  %1868 = vmatprep.mubr.bf16.mxu0 0
  %1869 = vmatmul.mubr.bf16.gmra.mrb[0].mxu0 %v1834
  %v1870 = vpop.f32.mrb[0].mxu0
  %v1871 = vadd.f32 %v1807, %v1870
  %v1872 = vpop.f32.mrb[0].mxu0
  %v1873 = vpop.f32.mrb[0].mxu0
  %v1874 = vadd.f32 %v1807, %v1873
  %v1875 = vpop.f32.mrb[0].mxu0
  %1876 = vdwg.mxu0
  %v1877 = vadd.f32 %v1871, %v1701
  %v1878 = vadd.f32 %v1874, %v1702
  %s1879 = scalar_lea.vmem %s15, 1
  %v1880 = vld [vmem:[%s1879] sm:$0x1]
  %s1881 = scalar_lea.vmem %s16, 1
  %v1882 = vld [vmem:[%s1881] sm:$0x1]
  %v1883 = vsel %vm95, %v1877, 0.0
  %1884 = vadd.xlane.f32.xlu0 %v1883
  %v1885 = vpop.xlane.xlu0 %1884
  %v1886 = vsel %vm95, %v1878, 0.0
  %1887 = vadd.xlane.f32.xlu0 %v1886
  %v1888 = vpop.xlane.xlu0 %1887
  %v1889 = vmul.f32 %v1885, %v102
  %v1890 = vmul.f32 %v1888, %v102
  %v1891 = vsub.f32 %v1877, %v1889
  %v1892 = vsub.f32 %v1878, %v1890
  %v1893 = vmul.f32 %v1891, %v1891
  %v1894 = vmul.f32 %v1892, %v1892
  %v1895 = vsel %vm95, %v1893, 0.0
  %1896 = vadd.xlane.f32.xlu0 %v1895
  %v1897 = vpop.xlane.xlu0 %1896
  %v1898 = vsel %vm95, %v1894, 0.0
  %1899 = vadd.xlane.f32.xlu0 %v1898
  %v1900 = vpop.xlane.xlu0 %1899
  %v1901 = vmul.f32 %v1897, %v102
  %v1902 = vmul.f32 %v1900, %v102
  %v1903 = vadd.f32 %v1901, 1e-12
  %v1904 = vadd.f32 %v1902, 1e-12
  %v1905 = vrsqrt.pop %v1903
  %v1906 = vrsqrt.pop %v1904
  %v1907 = vmul.f32 %v1891, %v1905
  %v1908 = vmul.f32 %v1892, %v1906
  %v1910 = vlaneseq
  %v1911 = vshrl.u32 %v1910, 7
  %v1912 = vsub.s32 0, %v1911
  %v1913 = vrot.slane %v1880, %v1912
  %v1915 = vmul.f32 %v1907, %v1913
  %v1916 = vmul.f32 %v1908, %v1913
  %v1918 = vlaneseq
  %v1919 = vshrl.u32 %v1918, 7
  %v1920 = vsub.s32 0, %v1919
  %v1921 = vrot.slane %v1882, %v1920
  %v1923 = vadd.f32 %v1915, %v1921
  %v1924 = vadd.f32 %v1916, %v1921
  %v1925 = vld [vmem:[%s2] sm:$0xf]
  %v1926 = vpack.c.bf16 %v1924, %v1923
  %v1928 = vsel %vm263, %v1925, 0
  %1930 = vmatprep.subr.bf16.mxu0 0
  %1931 = vmatpush1.bf16.msra.mxu0 %v1926
  %1932 = vmatprep.subr.bf16.mxu0 0
  %1933 = vmatpush1.bf16.msra.mxu0 0
  %1934 = vmatprep.subr.bf16.mxu0 0
  %1935 = vmatpush1.bf16.msra.mxu0 0
  %1936 = vmatprep.subr.bf16.mxu0 0
  %1937 = vmatpush1.bf16.msra.mxu0 0
  %1938 = vmatprep.subr.bf16.mxu0 0
  %1939 = vmatpush1.bf16.msra.mxu0 0
  %1940 = vmatprep.subr.bf16.mxu0 0
  %1941 = vmatpush1.bf16.msra.mxu0 0
  %1942 = vmatprep.subr.bf16.mxu0 0
  %1943 = vmatpush1.bf16.msra.mxu0 0
  %1944 = vmatprep.subr.bf16.mxu0 0
  %1945 = vmatpush1.bf16.msra.mxu0 0
  %1946 = vmatprep.subr.bf16.mxu0 0
  %1947 = vmatpush1.bf16.msra.mxu0 0
  %1948 = vmatprep.subr.bf16.mxu0 0
  %1949 = vmatpush1.bf16.msra.mxu0 0
  %1950 = vmatprep.subr.bf16.mxu0 0
  %1951 = vmatpush1.bf16.msra.mxu0 0
  %1952 = vmatprep.subr.bf16.mxu0 0
  %1953 = vmatpush1.bf16.msra.mxu0 0
  %1954 = vmatprep.subr.bf16.mxu0 0
  %1955 = vmatpush1.bf16.msra.mxu0 0
  %1956 = vmatprep.subr.bf16.mxu0 0
  %1957 = vmatpush1.bf16.msra.mxu0 0
  %1958 = vmatprep.subr.bf16.mxu0 0
  %1959 = vmatpush1.bf16.msra.mxu0 0
  %1960 = vmatprep.subr.bf16.mxu0 0
  %1961 = vmatpush1.bf16.msra.mxu0 0
  %1962 = vmatprep.mubr.bf16.mxu0 0
  %1963 = vmatmul.mubr.bf16.gmra.mrb[0].mxu0 %v1928
  %v1964 = vpop.f32.mrb[0].mxu0
  %v1965 = vadd.f32 0.0, %v1964
  %v1966 = vpop.f32.mrb[0].mxu0
  %v1967 = vpop.f32.mrb[0].mxu0
  %v1968 = vpop.f32.mrb[0].mxu0
  %1969 = vdwg.mxu0
  %v1970 = vpack.c.bf16 %v1965, %v1965
  %v1971 = vld [vmem:[%s17] sm:$0xf]
  %v1972 = vld [vmem:[%s17 + $0x4] sm:$0xf]
  %v1973 = vld [vmem:[%s17 + $0x8] sm:$0xf]
  %v1974 = vld [vmem:[%s17 + $0xc] sm:$0xf]
  %v1975 = vld [vmem:[%s18] sm:$0x1]
  %v1977 = vlaneseq
  %v1978 = vshrl.u32 %v1977, 7
  %v1979 = vsub.s32 0, %v1978
  %v1980 = vrot.slane %v1975, %v1979
  %v1986 = vunpack.c.l.b16 %v1971
  %v1987 = vunpack.c.l.b16 %v1972
  %v1988 = vunpack.c.l.b16 %v1973
  %v1989 = vunpack.c.l.b16 %v1974
  %v1990 = vpack.c.b16 %v1987, %v1986
  %v1991 = vpack.c.b16 %v1989, %v1988
  %v1995 = vsel %vm95, %v1970, 0
  %1997 = vmatprep.subr.bf16.mxu0 0
  %1998 = vmatpush1.bf16.msra.mxu0 %v1990
  %1999 = vmatprep.subr.bf16.mxu0 0
  %2000 = vmatpush1.bf16.msra.mxu0 %v1991
  %2001 = vmatprep.subr.bf16.mxu0 0
  %2002 = vmatpush1.bf16.msra.mxu0 0
  %2003 = vmatprep.subr.bf16.mxu0 0
  %2004 = vmatpush1.bf16.msra.mxu0 0
  %2005 = vmatprep.subr.bf16.mxu0 0
  %2006 = vmatpush1.bf16.msra.mxu0 0
  %2007 = vmatprep.subr.bf16.mxu0 0
  %2008 = vmatpush1.bf16.msra.mxu0 0
  %2009 = vmatprep.subr.bf16.mxu0 0
  %2010 = vmatpush1.bf16.msra.mxu0 0
  %2011 = vmatprep.subr.bf16.mxu0 0
  %2012 = vmatpush1.bf16.msra.mxu0 0
  %2013 = vmatprep.subr.bf16.mxu0 0
  %2014 = vmatpush1.bf16.msra.mxu0 0
  %2015 = vmatprep.subr.bf16.mxu0 0
  %2016 = vmatpush1.bf16.msra.mxu0 0
  %2017 = vmatprep.subr.bf16.mxu0 0
  %2018 = vmatpush1.bf16.msra.mxu0 0
  %2019 = vmatprep.subr.bf16.mxu0 0
  %2020 = vmatpush1.bf16.msra.mxu0 0
  %2021 = vmatprep.subr.bf16.mxu0 0
  %2022 = vmatpush1.bf16.msra.mxu0 0
  %2023 = vmatprep.subr.bf16.mxu0 0
  %2024 = vmatpush1.bf16.msra.mxu0 0
  %2025 = vmatprep.subr.bf16.mxu0 0
  %2026 = vmatpush1.bf16.msra.mxu0 0
  %2027 = vmatprep.subr.bf16.mxu0 0
  %2028 = vmatpush1.bf16.msra.mxu0 0
  %2029 = vmatprep.mubr.bf16.mxu0 0
  %2030 = vmatmul.mubr.bf16.gmra.mrb[0].mxu0 %v1995
  %v2031 = vpop.f32.mrb[0].mxu0
  %v2032 = vadd.f32 %v1980, %v2031
  %v2033 = vpop.f32.mrb[0].mxu0
  %v2034 = vpop.f32.mrb[0].mxu0
  %v2035 = vpop.f32.mrb[0].mxu0
  %2036 = vdwg.mxu0
  %2037 = vst [vmem:[%s19] sm:$0xff] %v2032
  // Predicated region
  $region78: #{forward.1} parent=0 // pred_check
    _
  $region79: #{forward.1} parent=0 // pred_check_branch
    %2039 = sbr.rel (0) target = $region81
  $region80: #{forward.1} parent=0 // pred_region
    _
  $region81: #{forward.1} parent=0 // pred_fallthru
    _
  // Predicated region
  $region82: #{forward.1} parent=0 // pred_check
    _
  $region83: #{forward.1} parent=0 // pred_check_branch
    %2041 = sbr.rel (0) target = $region85
  $region84: #{forward.1} parent=0 // pred_region
    _
  $region85: #{forward.1} parent=0 // pred_fallthru
    _

</llo_original>
